<compile_context>
chip_gen: v6e
topology: v6e:2x2x1
jax: 0.10.0
libtpu: 0.0.40
codegen_flags: <defaults>
</compile_context>

<pallas_src>
import math

import jax
import jax.numpy as jnp
from jax.experimental import pallas as pl
from jax.experimental.pallas import tpu as pltpu


def _lora_linear_kernel(x_ref, wt_ref, bt_ref, at_ref, bias_ref, o_ref,
                        xb_ref, acc_ref=None):
    """One (i, j, k) grid step of out = X @ Wt + bias + (X @ Bt) @ At_scaled."""
    j = pl.program_id(1)
    k = pl.program_id(2)
    nk = pl.num_programs(2)
    acc = o_ref if acc_ref is None else acc_ref

    @pl.when(k == 0)
    def _():
        acc[...] = jnp.zeros_like(acc)

    @pl.when((j == 0) & (k == 0))
    def _():
        xb_ref[...] = jnp.zeros_like(xb_ref)

    x = x_ref[...]                                     # already streaming dtype

    # Frozen base linear: X @ W.T == X @ Wt (pre-transposed). MXU-direct.
    acc[...] += jnp.dot(x, wt_ref[...], preferred_element_type=jnp.float32)

    # LoRA down-projection: computed only on the j == 0 sweep over k; the
    # (tm, r) scratch persists (per-core VMEM) and is reused for every j > 0.
    @pl.when(j == 0)
    def _():
        xb_ref[...] += jnp.dot(x, bt_ref[...], preferred_element_type=jnp.float32)

    # Finalize once per (i, j) output tile: rank-r up-projection (scale folded
    # into at in the wrapper) plus bias.
    @pl.when(k == nk - 1)
    def _():
        lora = jnp.dot(xb_ref[...], at_ref[...],
                       preferred_element_type=jnp.float32)
        o_ref[...] = (acc[...] + lora + bias_ref[...]).astype(o_ref.dtype)


def _pick_tile(dim, preferred, quantum):
    """Largest multiple of `quantum` <= preferred that divides dim, else dim."""
    if dim <= preferred:
        return dim
    t = (preferred // quantum) * quantum
    while t >= quantum:
        if dim % t == 0:
            return t
        t -= quantum
    return dim  # full extent (always a legal block shape; VMEM-guarded below)


def _padded_tile_bytes(rows, cols, dtype):
    """VMEM bytes of one buffered tile, honest about (sublane, 128) padding."""
    itemsize = jnp.dtype(dtype).itemsize
    sub_q = max(8 * 4 // itemsize, 8)      # 8 rows for f32, 16 for bf16
    pr = -(-rows // sub_q) * sub_q
    pc = -(-cols // 128) * 128
    return pr * pc * itemsize


def prepare_lora_params(weight, bias, lora_a, lora_b, scale,
                        *, weights_dtype=jnp.bfloat16):
    """One-time (cacheable) frozen-weight prep — keep OUT of the forward path.

    weight: (N, K); bias: (N,); lora_a: (N, r); lora_b: (r, K).
    Returns (wt, bt, at, bias2d): base/LoRA-down weights pre-transposed and cast
    to the streaming dtype, `scale` folded into the LoRA up matrix (kept f32).
    """
    wt = jnp.asarray(weight).T.astype(weights_dtype)             # (K, N)
    bt = jnp.asarray(lora_b).T.astype(weights_dtype)             # (K, r)
    at = (scale * jnp.asarray(lora_a)).T.astype(jnp.float32)     # (r, N)
    bias2d = jnp.asarray(bias).reshape(1, -1).astype(jnp.float32)
    return wt, bt, at, bias2d


def lora_linear_forward(x, wt, bt, at, bias2d, *, tm=512, tn=1024, tk=1024):
    """x: (B, S, K); wt: (K, N); bt: (K, r); at: (r, N) f32; bias2d: (1, N) f32."""
    B, S, K = x.shape
    K2, N = wt.shape
    assert K2 == K
    r = bt.shape[1]
    M = B * S

    stream_dtype = wt.dtype
    out_dtype = x.dtype

    tm_q = 16 if stream_dtype == jnp.bfloat16 else 8
    tm = _pick_tile(M, tm, tm_q)
    tn = _pick_tile(N, tn, 256 if N % 256 == 0 else 128)
    tk = _pick_tile(K, tk, 256 if K % 256 == 0 else 128)

    # Feed both v7x TensorCores: the parallel i axis needs >= 2 tiles.
    if M // tm < 2:
        tm_half = _pick_tile(M, max(tm // 2, tm_q), tm_q)
        if M // tm_half >= 2:
            tm = tm_half
    assert M % tm == 0 and N % tn == 0 and K % tk == 0

    # Single wrapper-side cast of X to the streaming dtype (halves X HBM
    # traffic on the bf16 path; removes the per-grid-step VPU cast).
    x2d = x.reshape(M, K).astype(stream_dtype)

    acc_in_out = (out_dtype == jnp.float32)
    scratch_shapes = [pltpu.VMEM((tm, r), jnp.float32)]           # xb (down-proj)
    if not acc_in_out:
        scratch_shapes.append(pltpu.VMEM((tm, tn), jnp.float32))  # f32 accumulator

    # Double-buffered VMEM footprint with layout padding.
    est = 2 * (_padded_tile_bytes(tm, tk, stream_dtype)        # X
               + _padded_tile_bytes(tk, tn, stream_dtype)      # W.T
               + _padded_tile_bytes(tk, r, stream_dtype)       # lora_b.T (lane-pads to 128)
               + _padded_tile_bytes(r, tn, jnp.float32)        # scaled lora_a.T
               + _padded_tile_bytes(1, tn, jnp.float32)        # bias (sublane-pads to 8)
               + _padded_tile_bytes(tm, tn, out_dtype))        # out
    est += _padded_tile_bytes(tm, r, jnp.float32)
    if not acc_in_out:
        est += _padded_tile_bytes(tm, tn, jnp.float32)
    cap = 48 << 20                                             # v7x: 64 MiB/TC physical
    if est > cap:
        raise ValueError(
            f"Tile selection needs ~{est >> 20} MiB VMEM (> {cap >> 20} MiB); "
            "use smaller tm/tn/tk or pad M/N/K to tileable multiples.")
    vmem_limit = int(min(max(est + (est // 4), 32 << 20), cap))

    out2d = pl.pallas_call(
        _lora_linear_kernel,
        out_shape=jax.ShapeDtypeStruct((M, N), out_dtype),
        grid_spec=pltpu.PrefetchScalarGridSpec(
            num_scalar_prefetch=0,
            grid=(M // tm, N // tn, K // tk),
            in_specs=[
                pl.BlockSpec((tm, tk), lambda i, j, k: (i, k)),   # X tile
                pl.BlockSpec((tk, tn), lambda i, j, k: (k, j)),   # W.T tile
                pl.BlockSpec((tk, r), lambda i, j, k: (k, 0)),    # lora_b.T tile
                pl.BlockSpec((r, tn), lambda i, j, k: (0, j)),    # scaled lora_a.T
                pl.BlockSpec((1, tn), lambda i, j, k: (0, j)),    # bias tile
            ],
            out_specs=pl.BlockSpec((tm, tn), lambda i, j, k: (i, j)),
            scratch_shapes=scratch_shapes,
        ),
        compiler_params=pltpu.CompilerParams(
            # j must NOT be megacore-split: the xb scratch filled at j == 0 is
            # reused by all later j tiles and scratch VMEM is per-core private.
            dimension_semantics=("parallel", "arbitrary", "arbitrary"),
            vmem_limit_bytes=vmem_limit),
    )(x2d, wt, bt, at, bias2d)

    return out2d.reshape(B, S, N)


def init_params(key, in_features, out_features, rank):
    """Deterministic parameter init mirroring the PyTorch module's shapes."""
    k_w, k_b, k_a, k_lb = jax.random.split(key, 4)
    # nn.Linear default init: U(-1/sqrt(in), 1/sqrt(in))
    lim = 1.0 / math.sqrt(in_features)
    weight = jax.random.uniform(k_w, (out_features, in_features),
                                jnp.float32, -lim, lim)
    bias = jax.random.uniform(k_b, (out_features,), jnp.float32, -lim, lim)
    # kaiming_normal_(a=0.01): std = sqrt(2/(1+a^2))/sqrt(fan_in=rank)
    std = math.sqrt(2.0 / (1.0 + 0.01 ** 2)) / math.sqrt(rank)
    lora_a = std * jax.random.normal(k_a, (out_features, rank), jnp.float32)
    lora_b = jax.random.normal(k_lb, (rank, in_features), jnp.float32)
    return weight, bias, lora_a, lora_b


if __name__ == "__main__":
    # Small shapes; feature dims match the module spec (in=768, out=512, r=8).
    batch_size, seq_len = 2, 64
    in_features, out_features = 768, 512
    rank, lora_alpha = 8, 16
    scale = lora_alpha / rank

    key = jax.random.PRNGKey(0)
    k_x, k_p = jax.random.split(key)
    x = jax.random.normal(k_x, (batch_size, seq_len, in_features), jnp.float32)
    weight, bias, lora_a, lora_b = init_params(k_p, in_features, out_features, rank)

    # Pure-JAX reference (high-precision matmuls).
    hp = jax.lax.Precision.HIGHEST
    ab = jnp.matmul(lora_a, lora_b, precision=hp)
    ref = (jnp.einsum("bsk,nk->bsn", x, weight, precision=hp)
           + bias
           + scale * jnp.einsum("bsk,nk->bsn", x, ab, precision=hp))

    fwd = jax.jit(lora_linear_forward)

    # Default throughput path: bf16 weight/X streaming, f32 accumulation.
    params_bf16 = prepare_lora_params(weight, bias, lora_a, lora_b, scale)
    out = jax.block_until_ready(fwd(x, *params_bf16))
    assert out.shape == (batch_size, seq_len, out_features)
    rel_err = float(jnp.max(jnp.abs(out - ref)) / jnp.max(jnp.abs(ref)))
    assert rel_err < 2.5e-2, f"bf16 path relative error too large: {rel_err}"

    # Opt-in exact f32 path.
    params_f32 = prepare_lora_params(weight, bias, lora_a, lora_b, scale,
                                     weights_dtype=jnp.float32)
    out_f32 = jax.block_until_ready(fwd(x, *params_f32))
    assert out_f32.shape == (batch_size, seq_len, out_features)
    assert jnp.allclose(out_f32, ref, atol=1e-2, rtol=1e-3)

    print("KERNEL_OK")
</pallas_src>

<mosaic_0001>
module attributes {stable_mosaic.version = 11 : i64} {
  func.func @_lora_linear_kernel(%arg0: i32, %arg1: i32, %arg2: i32, %arg3: memref<64x768xbf16, #tpu.memory_space<vmem>>, %arg4: memref<768x512xbf16, #tpu.memory_space<vmem>>, %arg5: memref<768x8xbf16, #tpu.memory_space<vmem>>, %arg6: memref<8x512xf32, #tpu.memory_space<vmem>>, %arg7: memref<1x512xf32, #tpu.memory_space<vmem>>, %arg8: memref<64x512xf32, #tpu.memory_space<vmem>>, %arg9: memref<64x8xf32, #tpu.memory_space<vmem>>) attributes {dimension_semantics = [#tpu.dimension_semantics<parallel>, #tpu.dimension_semantics<arbitrary>, #tpu.dimension_semantics<arbitrary>], iteration_bounds = array<i64: 2, 1, 1>, scalar_prefetch = 0 : i64, scratch_operands = 1 : i64, tpu.core_type = #tpu.core_type<tc>, window_params = [{transform_indices = @transform_0, window_bounds = array<i64: 64, 768>}, {transform_indices = @transform_1, window_bounds = array<i64: 768, 512>}, {transform_indices = @transform_2, window_bounds = array<i64: 768, 8>}, {transform_indices = @transform_3, window_bounds = array<i64: 8, 512>}, {transform_indices = @transform_4, window_bounds = array<i64: 1, 512>}, {transform_indices = @transform_5, window_bounds = array<i64: 64, 512>}]} {
    %c0_i32 = arith.constant 0 : i32
    %0 = arith.cmpi eq, %arg2, %c0_i32 : i32
    %1 = arith.extui %0 : i1 to i32
    %c0_i32_0 = arith.constant 0 : i32
    %2 = arith.cmpi ne, %1, %c0_i32_0 : i32
    scf.if %2 {
      %cst_15 = arith.constant 0.000000e+00 : f32
      %20 = vector.broadcast %cst_15 : f32 to vector<64x512xf32>
      %c0_16 = arith.constant 0 : index
      %c0_17 = arith.constant 0 : index
      %21 = vector.load %arg8[%c0_16, %c0_17] : memref<64x512xf32, #tpu.memory_space<vmem>>, vector<64x512xf32>
      tpu.vector_store %arg8[%c0_16, %c0_17], %20 {strides = array<i32>} : memref<64x512xf32, #tpu.memory_space<vmem>>, vector<64x512xf32>,
    } else {
    }
    %c0_i32_1 = arith.constant 0 : i32
    %3 = arith.cmpi eq, %arg1, %c0_i32_1 : i32
    %c0_i32_2 = arith.constant 0 : i32
    %4 = arith.cmpi eq, %arg2, %c0_i32_2 : i32
    %5 = arith.andi %3, %4 : i1
    %6 = arith.extui %5 : i1 to i32
    %c0_i32_3 = arith.constant 0 : i32
    %7 = arith.cmpi ne, %6, %c0_i32_3 : i32
    scf.if %7 {
      %cst_15 = arith.constant 0.000000e+00 : f32
      %20 = vector.broadcast %cst_15 : f32 to vector<64x8xf32>
      %c0_16 = arith.constant 0 : index
      %c0_17 = arith.constant 0 : index
      %21 = vector.load %arg9[%c0_16, %c0_17] : memref<64x8xf32, #tpu.memory_space<vmem>>, vector<64x8xf32>
      tpu.vector_store %arg9[%c0_16, %c0_17], %20 {strides = array<i32>} : memref<64x8xf32, #tpu.memory_space<vmem>>, vector<64x8xf32>,
    } else {
    }
    %c0 = arith.constant 0 : index
    %c0_4 = arith.constant 0 : index
    %8 = vector.load %arg3[%c0, %c0_4] : memref<64x768xbf16, #tpu.memory_space<vmem>>, vector<64x768xbf16>
    %c0_5 = arith.constant 0 : index
    %c0_6 = arith.constant 0 : index
    %9 = vector.load %arg8[%c0_5, %c0_6] : memref<64x512xf32, #tpu.memory_space<vmem>>, vector<64x512xf32>
    %c0_7 = arith.constant 0 : index
    %c0_8 = arith.constant 0 : index
    %10 = vector.load %arg4[%c0_7, %c0_8] : memref<768x512xbf16, #tpu.memory_space<vmem>>, vector<768x512xbf16>
    %cst = arith.constant dense<0.000000e+00> : vector<64x512xf32>
    %11 = tpu.matmul %8, %10, %cst {dimension_numbers = #tpu.dot_dimension_numbers<[1], [0], [0], [1], [0, 0, 1, 1], [], []>} : vector<64x768xbf16>, vector<768x512xbf16>, vector<64x512xf32> -> vector<64x512xf32>
    %12 = arith.addf %9, %11 : vector<64x512xf32>
    %c0_9 = arith.constant 0 : index
    %c0_10 = arith.constant 0 : index
    %13 = vector.load %arg8[%c0_9, %c0_10] : memref<64x512xf32, #tpu.memory_space<vmem>>, vector<64x512xf32>
    tpu.vector_store %arg8[%c0_9, %c0_10], %12 {strides = array<i32>} : memref<64x512xf32, #tpu.memory_space<vmem>>, vector<64x512xf32>,
    %c0_i32_11 = arith.constant 0 : i32
    %14 = arith.cmpi eq, %arg1, %c0_i32_11 : i32
    %15 = arith.extui %14 : i1 to i32
    %c0_i32_12 = arith.constant 0 : i32
    %16 = arith.cmpi ne, %15, %c0_i32_12 : i32
    scf.if %16 {
      %c0_15 = arith.constant 0 : index
      %c0_16 = arith.constant 0 : index
      %20 = vector.load %arg9[%c0_15, %c0_16] : memref<64x8xf32, #tpu.memory_space<vmem>>, vector<64x8xf32>
      %c0_17 = arith.constant 0 : index
      %c0_18 = arith.constant 0 : index
      %21 = vector.load %arg5[%c0_17, %c0_18] : memref<768x8xbf16, #tpu.memory_space<vmem>>, vector<768x8xbf16>
      %cst_19 = arith.constant dense<0.000000e+00> : vector<64x8xf32>
      %22 = tpu.matmul %8, %21, %cst_19 {dimension_numbers = #tpu.dot_dimension_numbers<[1], [0], [0], [1], [0, 0, 1, 1], [], []>} : vector<64x768xbf16>, vector<768x8xbf16>, vector<64x8xf32> -> vector<64x8xf32>
      %23 = arith.addf %20, %22 : vector<64x8xf32>
      %c0_20 = arith.constant 0 : index
      %c0_21 = arith.constant 0 : index
      %24 = vector.load %arg9[%c0_20, %c0_21] : memref<64x8xf32, #tpu.memory_space<vmem>>, vector<64x8xf32>
      tpu.vector_store %arg9[%c0_20, %c0_21], %23 {strides = array<i32>} : memref<64x8xf32, #tpu.memory_space<vmem>>, vector<64x8xf32>,
    } else {
    }
    %c0_i32_13 = arith.constant 0 : i32
    %17 = arith.cmpi eq, %arg2, %c0_i32_13 : i32
    %18 = arith.extui %17 : i1 to i32
    %c0_i32_14 = arith.constant 0 : i32
    %19 = arith.cmpi ne, %18, %c0_i32_14 : i32
    scf.if %19 {
      %c0_15 = arith.constant 0 : index
      %c0_16 = arith.constant 0 : index
      %20 = vector.load %arg9[%c0_15, %c0_16] : memref<64x8xf32, #tpu.memory_space<vmem>>, vector<64x8xf32>
      %c0_17 = arith.constant 0 : index
      %c0_18 = arith.constant 0 : index
      %21 = vector.load %arg6[%c0_17, %c0_18] : memref<8x512xf32, #tpu.memory_space<vmem>>, vector<8x512xf32>
      %cst_19 = arith.constant dense<0.000000e+00> : vector<64x512xf32>
      %22 = tpu.matmul %20, %21, %cst_19 {dimension_numbers = #tpu.dot_dimension_numbers<[1], [0], [0], [1], [0, 0, 1, 1], [], []>} : vector<64x8xf32>, vector<8x512xf32>, vector<64x512xf32> -> vector<64x512xf32>
      %c0_20 = arith.constant 0 : index
      %c0_21 = arith.constant 0 : index
      %23 = vector.load %arg8[%c0_20, %c0_21] : memref<64x512xf32, #tpu.memory_space<vmem>>, vector<64x512xf32>
      %24 = arith.addf %23, %22 : vector<64x512xf32>
      %c0_22 = arith.constant 0 : index
      %c0_23 = arith.constant 0 : index
      %25 = vector.load %arg7[%c0_22, %c0_23] : memref<1x512xf32, #tpu.memory_space<vmem>>, vector<1x512xf32>
      %26 = vector.broadcast %25 : vector<1x512xf32> to vector<64x512xf32>
      %27 = arith.addf %24, %26 : vector<64x512xf32>
      %c0_24 = arith.constant 0 : index
      %c0_25 = arith.constant 0 : index
      %28 = vector.load %arg8[%c0_24, %c0_25] : memref<64x512xf32, #tpu.memory_space<vmem>>, vector<64x512xf32>
      tpu.vector_store %arg8[%c0_24, %c0_25], %27 {strides = array<i32>} : memref<64x512xf32, #tpu.memory_space<vmem>>, vector<64x512xf32>,
    } else {
    }
    return
  }
  func.func @transform_0(%arg0: i32, %arg1: i32, %arg2: i32) -> (i32, i32) {
    %c0_i32 = arith.constant 0 : i32
    return %arg0, %arg2 : i32, i32
  }
  func.func @transform_1(%arg0: i32, %arg1: i32, %arg2: i32) -> (i32, i32) {
    %c0_i32 = arith.constant 0 : i32
    return %arg2, %arg1 : i32, i32
  }
  func.func @transform_2(%arg0: i32, %arg1: i32, %arg2: i32) -> (i32, i32) {
    %c0_i32 = arith.constant 0 : i32
    %c0_i32_0 = arith.constant 0 : i32
    return %arg2, %c0_i32 : i32, i32
  }
  func.func @transform_3(%arg0: i32, %arg1: i32, %arg2: i32) -> (i32, i32) {
    %c0_i32 = arith.constant 0 : i32
    %c0_i32_0 = arith.constant 0 : i32
    return %c0_i32, %arg1 : i32, i32
  }
  func.func @transform_4(%arg0: i32, %arg1: i32, %arg2: i32) -> (i32, i32) {
    %c0_i32 = arith.constant 0 : i32
    %c0_i32_0 = arith.constant 0 : i32
    return %c0_i32, %arg1 : i32, i32
  }
  func.func @transform_5(%arg0: i32, %arg1: i32, %arg2: i32) -> (i32, i32) {
    %c0_i32 = arith.constant 0 : i32
    return %arg0, %arg1 : i32, i32
  }
}

</mosaic_0001>

<llo_original>
// kernel: lora_linear_forward.1
$region0: #{lora_linear_forward.1}
  #allocation0 [shape = 'u32[]', space=smem, size = 0x4, offset = 0x4, fixed_abs, tag = 'smem constant byte address 0x4 - core index']
  #allocation1 [shape = 'u32[144,128]{1,0:T(1,128)}', space=vmem, size = 0x12000, scoped, tag = 'internal scratch']
  #allocation2 [shape = 'f32[64,8]{1,0:T(8,128)}', space=vmem, size = 0x8000, scoped, tag = 'scratch operand']
  %s0 = inlined_call_operand.vmem [shape: bf16[128,768], index: 0, kind: input, shape index: {}]
  %s1 = inlined_call_operand.vmem [shape: bf16[768,512], index: 1, kind: input, shape index: {}]
  %s2 = inlined_call_operand.vmem [shape: bf16[768,8], index: 2, kind: input, shape index: {}]
  %s3 = inlined_call_operand.hbm [shape: f32[8,512], index: 3, kind: input, shape index: {}]
  %s4 = inlined_call_operand.vmem [shape: f32[1,512], index: 4, kind: input, shape index: {}]
  %s5 = inlined_call_operand.hbm [shape: f32[128,512], index: 5, kind: output, shape index: {}]
  %s6 = sld [smem:[#allocation0]]
  $region73: #{lora_linear_forward.1} parent=0
    _
  %s8 = ssub.s32 1, %s6
  %s9 = scalar_select 0, %s8, %s6
  $region1: #{lora_linear_forward.1} parent=0
    #allocation3 [shape = 'u8[16384]{0}', space=vmem, size = 0x4000, scoped, tag = 'input window, operand 3, single buffered']
    #allocation4 [shape = 's32[2]{0}', space=sflag, size = 0x8, scoped, tag = 'scoped memory for lora_linear_forward.1']
    #allocation5 [shape = 's32[2]{0}', space=sflag, size = 0x8, scoped, tag = 'scoped memory for lora_linear_forward.1']
    #allocation6 [shape = 'u8[262144]{0}', space=vmem, size = 0x40000, scoped, tag = 'output window, operand 0']
    %10 = vsyncpa [#allocation4], 0
    %11 = vsyncpa [#allocation5], 0
    %s12 = scalar_lea.sflag [#allocation5], 1
    %13 = vsyncpa %s12, 0
    loop: start=0, step=1, limit=4
    $region2: #{lora_linear_forward.1} parent=1 // loop_pre_header
      _
    $region3: #{lora_linear_forward.1} parent=1 // loop_header
      %s15 = sphi 0, %s19
      %p16 = scmp.ge.s32.totalorder %s15, 4
      %s22 = sphi 0, %s41
      %s23 = sphi 0, %s37
      %s24 = sphi 0, %s33
      %s25 = sphi 0, %s22
      %s26 = sphi 0, %s23
      %s27 = sphi 0, %s24
      %s28 = sphi 0, %s25
      %s29 = sphi 0, %s26
      %s30 = sphi 0, %s27
      %s46 = sphi 0, %s48
      %s49 = sphi 0, %s46
      %s50 = sphi 0, %s49
      %s66 = sphi 0, %s50
      %s74 = sphi 0, %s76
      %s77 = sphi 0, %s74
      %s78 = sphi 0, %s77
      %s94 = sphi 0, %s78
      %s100 = sphi 0, %s102
      %s103 = sphi 0, %s100
      %s104 = sphi 0, %s103
      %s120 = sphi 0, %s104
      %s126 = sphi 0, %s128
      %s129 = sphi 0, %s126
      %s130 = sphi 0, %s129
      %s146 = sphi 0, %s130
      %s152 = sphi 0, %s154
      %s155 = sphi 0, %s152
      %s156 = sphi 0, %s155
      %s172 = sphi 0, %s156
      %s180 = sphi 0, %s182
      %s183 = sphi 0, %s180
      %s184 = sphi 0, %s183
      %s200 = sphi 0, %s184
    $region4: #{lora_linear_forward.1} parent=1 // loop_header_branch
      %18 = sbr.rel (%p16) target = $region8
    $region5: #{lora_linear_forward.1} parent=1 // loop_body
      %s20 = ssub.s32 %s15, 1
      %s21 = ssub.s32 %s15, 2
      %s31 = sadd.s32 1, %s24
      %p32 = scmp.ge.s32.totalorder %s31, 1
      %s33 = scalar_select %p32, 0, %s31
      %s34 = sadd.s32 1, %s23
      %s35 = scalar_select %p32, %s34, %s23
      %p36 = scmp.ge.s32.totalorder %s35, 1
      %s37 = scalar_select %p36, 0, %s35
      %s38 = sadd.s32 1, %s22
      %s39 = scalar_select %p36, %s38, %s22
      %p40 = scmp.ge.s32.totalorder %s39, 2
      %s41 = scalar_select %p40, 0, %s39
      %s42 = ssub.s32 %s22, %s41
      %s43 = ssub.s32 %s24, %s33
      %s44 = sor.u32 %s42, %s43
      %p45 = scmp.eq.s32.totalorder %s44, 0
      %s47 = sadd.s32 %s46, 1
      %s48 = scalar_select %p45, %s46, %s47
      %p51 = pneg %p45
      %p52 = scmp.eq.s32.totalorder %s15, 1
      %p53 = por %p51, %p52
      %p54 = scmp.ne.s32.totalorder %s46, %s49
      %p55 = scmp.eq.s32.totalorder %s15, 0
      %p56 = por %p54, %p55
      %p57 = scmp.ne.s32.totalorder %s46, %s49
      %p58 = scmp.eq.s32.totalorder %s20, 1
      %p59 = por %p57, %p58
      %p60 = scmp.ne.s32.totalorder %s49, %s50
      %p61 = scmp.eq.s32.totalorder %s20, 0
      %p62 = por %p60, %p61
      %p63 = scmp.ne.s32.totalorder %s49, %s50
      %p64 = scmp.eq.s32.totalorder %s21, 1
      %p65 = por %p63, %p64
      %p67 = scmp.ne.s32.totalorder %s50, %s66
      %p68 = scmp.eq.s32.totalorder %s21, 0
      %p69 = por %p67, %p68
      %s70 = ssub.s32 %s24, %s33
      %s71 = ssub.s32 %s23, %s37
      %s72 = sor.u32 %s70, %s71
      %p73 = scmp.eq.s32.totalorder %s72, 0
      %s75 = sadd.s32 %s74, 1
      %s76 = scalar_select %p73, %s74, %s75
      %p79 = pneg %p73
      %p80 = scmp.eq.s32.totalorder %s15, 1
      %p81 = por %p79, %p80
      %p82 = scmp.ne.s32.totalorder %s74, %s77
      %p83 = scmp.eq.s32.totalorder %s15, 0
      %p84 = por %p82, %p83
      %p85 = scmp.ne.s32.totalorder %s74, %s77
      %p86 = scmp.eq.s32.totalorder %s20, 1
      %p87 = por %p85, %p86
      %p88 = scmp.ne.s32.totalorder %s77, %s78
      %p89 = scmp.eq.s32.totalorder %s20, 0
      %p90 = por %p88, %p89
      %p91 = scmp.ne.s32.totalorder %s77, %s78
      %p92 = scmp.eq.s32.totalorder %s21, 1
      %p93 = por %p91, %p92
      %p95 = scmp.ne.s32.totalorder %s78, %s94
      %p96 = scmp.eq.s32.totalorder %s21, 0
      %p97 = por %p95, %p96
      %s98 = ssub.s32 %s24, %s33
      %p99 = scmp.eq.s32.totalorder %s98, 0
      %s101 = sadd.s32 %s100, 1
      %s102 = scalar_select %p99, %s100, %s101
      %p105 = pneg %p99
      %p106 = scmp.eq.s32.totalorder %s15, 1
      %p107 = por %p105, %p106
      %p108 = scmp.ne.s32.totalorder %s100, %s103
      %p109 = scmp.eq.s32.totalorder %s15, 0
      %p110 = por %p108, %p109
      %p111 = scmp.ne.s32.totalorder %s100, %s103
      %p112 = scmp.eq.s32.totalorder %s20, 1
      %p113 = por %p111, %p112
      %p114 = scmp.ne.s32.totalorder %s103, %s104
      %p115 = scmp.eq.s32.totalorder %s20, 0
      %p116 = por %p114, %p115
      %p117 = scmp.ne.s32.totalorder %s103, %s104
      %p118 = scmp.eq.s32.totalorder %s21, 1
      %p119 = por %p117, %p118
      %p121 = scmp.ne.s32.totalorder %s104, %s120
      %p122 = scmp.eq.s32.totalorder %s21, 0
      %p123 = por %p121, %p122
      %s124 = ssub.s32 %s23, %s37
      %p125 = scmp.eq.s32.totalorder %s124, 0
      %s127 = sadd.s32 %s126, 1
      %s128 = scalar_select %p125, %s126, %s127
      %p131 = pneg %p125
      %p132 = scmp.eq.s32.totalorder %s15, 1
      %p133 = por %p131, %p132
      %p134 = scmp.ne.s32.totalorder %s126, %s129
      %p135 = scmp.eq.s32.totalorder %s15, 0
      %p136 = por %p134, %p135
      %p137 = scmp.ne.s32.totalorder %s126, %s129
      %p138 = scmp.eq.s32.totalorder %s20, 1
      %p139 = por %p137, %p138
      %p140 = scmp.ne.s32.totalorder %s129, %s130
      %p141 = scmp.eq.s32.totalorder %s20, 0
      %p142 = por %p140, %p141
      %p143 = scmp.ne.s32.totalorder %s129, %s130
      %p144 = scmp.eq.s32.totalorder %s21, 1
      %p145 = por %p143, %p144
      %p147 = scmp.ne.s32.totalorder %s130, %s146
      %p148 = scmp.eq.s32.totalorder %s21, 0
      %p149 = por %p147, %p148
      %s150 = ssub.s32 %s23, %s37
      %p151 = scmp.eq.s32.totalorder %s150, 0
      %s153 = sadd.s32 %s152, 1
      %s154 = scalar_select %p151, %s152, %s153
      %p157 = pneg %p151
      %p158 = scmp.eq.s32.totalorder %s15, 1
      %p159 = por %p157, %p158
      %p160 = scmp.ne.s32.totalorder %s152, %s155
      %p161 = scmp.eq.s32.totalorder %s15, 0
      %p162 = por %p160, %p161
      %p163 = scmp.ne.s32.totalorder %s152, %s155
      %p164 = scmp.eq.s32.totalorder %s20, 1
      %p165 = por %p163, %p164
      %p166 = scmp.ne.s32.totalorder %s155, %s156
      %p167 = scmp.eq.s32.totalorder %s20, 0
      %p168 = por %p166, %p167
      %p169 = scmp.ne.s32.totalorder %s155, %s156
      %p170 = scmp.eq.s32.totalorder %s21, 1
      %p171 = por %p169, %p170
      %p173 = scmp.ne.s32.totalorder %s156, %s172
      %p174 = scmp.eq.s32.totalorder %s21, 0
      %p175 = por %p173, %p174
      %s176 = ssub.s32 %s22, %s41
      %s177 = ssub.s32 %s23, %s37
      %s178 = sor.u32 %s176, %s177
      %p179 = scmp.eq.s32.totalorder %s178, 0
      %s181 = sadd.s32 %s180, 1
      %s182 = scalar_select %p179, %s180, %s181
      %p185 = pneg %p179
      %p186 = scmp.eq.s32.totalorder %s15, 1
      %p187 = por %p185, %p186
      %p188 = scmp.ne.s32.totalorder %s180, %s183
      %p189 = scmp.eq.s32.totalorder %s15, 0
      %p190 = por %p188, %p189
      %p191 = scmp.ne.s32.totalorder %s180, %s183
      %p192 = scmp.eq.s32.totalorder %s20, 1
      %p193 = por %p191, %p192
      %p194 = scmp.ne.s32.totalorder %s183, %s184
      %p195 = scmp.eq.s32.totalorder %s20, 0
      %p196 = por %p194, %p195
      %p197 = scmp.ne.s32.totalorder %s183, %s184
      %p198 = scmp.eq.s32.totalorder %s21, 1
      %p199 = por %p197, %p198
      %p201 = scmp.ne.s32.totalorder %s184, %s200
      %p202 = scmp.eq.s32.totalorder %s21, 0
      %p203 = por %p201, %p202
      %p204 = scmp.le.s32.totalorder 1, %s15
      %p205 = scmp.lt.s32.totalorder %s15, 3
      %p206 = pnand %p204, %p205
      %p207 = pneg %p206
      // Predicated region
      $region9: #{lora_linear_forward.1} parent=5 // pred_check
        _
      $region10: #{lora_linear_forward.1} parent=5 // pred_check_branch
        %209 = sbr.rel (%p206) target = $region12
      $region11: #{lora_linear_forward.1} parent=5 // pred_region
        %s210 = ssub.s32 %s15, 1
        // Predicated region
        $region13: #{lora_linear_forward.1} parent=11 // pred_check
          %p211 = pneg %p90
        $region14: #{lora_linear_forward.1} parent=11 // pred_check_branch
          %213 = sbr.rel (%p211) target = $region16
        $region15: #{lora_linear_forward.1} parent=11 // pred_region
          %s214 = smul.u32 96, %s27
          %s215 = smul.u32 4, %s26
          %p216 = scmp.lt.s32.totalorder %s214, 95
          %s217 = scalar_select %p216, %s214, 95
          %p218 = scmp.lt.s32.totalorder %s215, 3
          %s219 = scalar_select %p218, %s215, 3
          %s220 = smul.addr %s217, 4
          %s221 = sadd.s32 %s219, %s220
          %s222 = smul.addr %s221, 4
          %s223 = scalar_lea.vmem %s1, %s222
          %s224 = smul.u32 96, %s27
          %s225 = smul.u32 4, %s26
        $region16: #{lora_linear_forward.1} parent=11 // pred_fallthru
          _
        // Predicated region
        $region17: #{lora_linear_forward.1} parent=11 // pred_check
          %p226 = pneg %p116
        $region18: #{lora_linear_forward.1} parent=11 // pred_check_branch
          %228 = sbr.rel (%p226) target = $region20
        $region19: #{lora_linear_forward.1} parent=11 // pred_region
          %s229 = smul.u32 96, %s27
          %p230 = scmp.lt.s32.totalorder %s229, 95
          %s231 = scalar_select %p230, %s229, 95
          %s232 = smul.addr %s231, 4
          %s233 = scalar_lea.vmem %s2, %s232
          %s234 = smul.u32 96, %s27
        $region20: #{lora_linear_forward.1} parent=11 // pred_fallthru
          _
        // Predicated region
        $region21: #{lora_linear_forward.1} parent=11 // pred_check
          %p235 = pneg %p142
        $region22: #{lora_linear_forward.1} parent=11 // pred_check_branch
          %237 = sbr.rel (%p235) target = $region24
        $region23: #{lora_linear_forward.1} parent=11 // pred_region
          %s238 = smul.u32 4, %s26
          %s240 = ssub.s32 512, 512
          %241 = vsyncadd [#allocation4], %s240
          %s242 = smul.addr %s238, 128
          %s243 = scalar_lea.hbm %s3, %s242
          %s245 = sshll.u32 [#allocation3], 4
          %s246 = int_to_ptr.vmem [resolvable:$true] %s245
          %248 = dma.hbm_to_vmem [thread:$0]  %s243, 512, %s246, [#allocation4]
        $region24: #{lora_linear_forward.1} parent=11 // pred_fallthru
          _
        // Predicated region
        $region25: #{lora_linear_forward.1} parent=11 // pred_check
          %p249 = pneg %p168
        $region26: #{lora_linear_forward.1} parent=11 // pred_check_branch
          %251 = sbr.rel (%p249) target = $region28
        $region27: #{lora_linear_forward.1} parent=11 // pred_region
          %s252 = smul.u32 4, %s26
          %p253 = scmp.lt.s32.totalorder %s252, 3
          %s254 = scalar_select %p253, %s252, 3
          %s255 = scalar_lea.vmem %s4, %s254
          %s256 = smul.u32 4, %s26
        $region28: #{lora_linear_forward.1} parent=11 // pred_fallthru
          _
      $region12: #{lora_linear_forward.1} parent=5 // pred_fallthru
        _
      %p257 = scmp.lt.s32.totalorder %s15, 2
      // Predicated region
      $region29: #{lora_linear_forward.1} parent=5 // pred_check
        %p258 = pneg %p257
      $region30: #{lora_linear_forward.1} parent=5 // pred_check_branch
        %260 = sbr.rel (%p258) target = $region32
      $region31: #{lora_linear_forward.1} parent=5 // pred_region
        // Predicated region
        $region33: #{lora_linear_forward.1} parent=31 // pred_check
          %p261 = pneg %p56
        $region34: #{lora_linear_forward.1} parent=31 // pred_check_branch
          %263 = sbr.rel (%p261) target = $region36
        $region35: #{lora_linear_forward.1} parent=31 // pred_region
          %s264 = smul.u32 8, %s22
          %s265 = smul.u32 6, %s24
          %p266 = scmp.lt.s32.totalorder %s264, 15
          %s267 = scalar_select %p266, %s264, 15
          %p268 = scmp.lt.s32.totalorder %s265, 5
          %s269 = scalar_select %p268, %s265, 5
          %s270 = smul.addr %s267, 6
          %s271 = sadd.s32 %s269, %s270
          %s272 = smul.addr %s271, 4
          %s273 = scalar_lea.vmem %s0, %s272
          %s274 = smul.u32 8, %s22
          %s275 = smul.u32 6, %s24
        $region36: #{lora_linear_forward.1} parent=31 // pred_fallthru
          _
      $region32: #{lora_linear_forward.1} parent=5 // pred_fallthru
        _
      %p276 = scmp.le.s32.totalorder 1, %s15
      %p277 = scmp.lt.s32.totalorder %s15, 3
      %p278 = pnand %p276, %p277
      %p279 = pneg %p278
      // Predicated region
      $region37: #{lora_linear_forward.1} parent=5 // pred_check
        _
      $region38: #{lora_linear_forward.1} parent=5 // pred_check_branch
        %281 = sbr.rel (%p278) target = $region40
      $region39: #{lora_linear_forward.1} parent=5 // pred_region
        %s282 = ssub.s32 %s15, 1
        // Predicated region
        $region41: #{lora_linear_forward.1} parent=39 // pred_check
          %p283 = pneg %p142
        $region42: #{lora_linear_forward.1} parent=39 // pred_check_branch
          %285 = sbr.rel (%p283) target = $region44
        $region43: #{lora_linear_forward.1} parent=39 // pred_region
          %286 = dma.done [#allocation4], 512
        $region44: #{lora_linear_forward.1} parent=39 // pred_fallthru
          _
        %s287 = smul.u32 8, %s25
        %s288 = smul.u32 6, %s27
        %p289 = scmp.lt.s32.totalorder %s287, 15
        %s290 = scalar_select %p289, %s287, 15
        %p291 = scmp.lt.s32.totalorder %s288, 5
        %s292 = scalar_select %p291, %s288, 5
        %s293 = smul.addr %s290, 6
        %s294 = sadd.s32 %s292, %s293
        %s295 = smul.addr %s294, 4
        %s296 = scalar_lea.vmem %s0, %s295
        %p297 = pneg %p62
        %p298 = pneg %p59
        %s299 = smul.u32 96, %s27
        %s300 = smul.u32 4, %s26
        %p301 = scmp.lt.s32.totalorder %s299, 95
        %s302 = scalar_select %p301, %s299, 95
        %p303 = scmp.lt.s32.totalorder %s300, 3
        %s304 = scalar_select %p303, %s300, 3
        %s305 = smul.addr %s302, 4
        %s306 = sadd.s32 %s304, %s305
        %s307 = smul.addr %s306, 4
        %s308 = scalar_lea.vmem %s1, %s307
        %p309 = pneg %p90
        %p310 = pneg %p87
        %s311 = smul.u32 96, %s27
        %p312 = scmp.lt.s32.totalorder %s311, 95
        %s313 = scalar_select %p312, %s311, 95
        %s314 = smul.addr %s313, 4
        %s315 = scalar_lea.vmem %s2, %s314
        %p316 = pneg %p116
        %p317 = pneg %p113
        %p318 = pneg %p142
        %p319 = pneg %p139
        %s320 = smul.u32 4, %s26
        %p321 = scmp.lt.s32.totalorder %s320, 3
        %s322 = scalar_select %p321, %s320, 3
        %s323 = scalar_lea.vmem %s4, %s322
        %p324 = pneg %p168
        %p325 = pneg %p165
        %p326 = pneg %p196
        %p327 = pneg %p193
        %s328 = sand.u32 %s183, 1
        %s329 = scalar_lea.sflag [#allocation5], %s328
        %s330 = sand.u32 %s183, 1
        %s331 = smul.addr %s330, 256
        %s332 = scalar_lea.vmem [#allocation6], %s331
        %s333 = smul.u32 8, %s25
        %s334 = smul.u32 6, %s27
        %p335 = scmp.lt.s32.totalorder %s333, 15
        %s336 = scalar_select %p335, %s333, 15
        %p337 = scmp.lt.s32.totalorder %s334, 5
        %s338 = scalar_select %p337, %s334, 5
        %s339 = smul.addr %s336, 6
        %s340 = sadd.s32 %s338, %s339
        %s341 = smul.addr %s340, 4
        %s342 = scalar_lea.vmem %s0, %s341
        %s343 = smul.u32 8, %s25
        %s344 = smul.u32 6, %s27
        %s345 = smul.u32 96, %s27
        %s346 = smul.u32 4, %s26
        %p347 = scmp.lt.s32.totalorder %s345, 95
        %s348 = scalar_select %p347, %s345, 95
        %p349 = scmp.lt.s32.totalorder %s346, 3
        %s350 = scalar_select %p349, %s346, 3
        %s351 = smul.addr %s348, 4
        %s352 = sadd.s32 %s350, %s351
        %s353 = smul.addr %s352, 4
        %s354 = scalar_lea.vmem %s1, %s353
        %s355 = smul.u32 96, %s27
        %s356 = smul.u32 4, %s26
        %s357 = smul.u32 96, %s27
        %p358 = scmp.lt.s32.totalorder %s357, 95
        %s359 = scalar_select %p358, %s357, 95
        %s360 = smul.addr %s359, 4
        %s361 = scalar_lea.vmem %s2, %s360
        %s362 = smul.u32 96, %s27
        %s363 = smul.u32 4, %s26
        %s364 = smul.u32 4, %s26
        %p365 = scmp.lt.s32.totalorder %s364, 3
        %s366 = scalar_select %p365, %s364, 3
        %s367 = scalar_lea.vmem %s4, %s366
        %s368 = smul.u32 4, %s26
        %s369 = smul.u32 8, %s25
        %s370 = smul.u32 4, %s26
        %p372 = scmp.eq.s32.totalorder %s27, 0
        // Predicated region
        $region45: #{lora_linear_forward.1} parent=39 // pred_check
          %p373 = pneg %p372
        $region46: #{lora_linear_forward.1} parent=39 // pred_check_branch
          %375 = sbr.rel (%p373) target = $region48
        $region47: #{lora_linear_forward.1} parent=39 // pred_region
          %376 = vst [vmem:[%s332] sm:$0xff] 0.0
          %377 = vst [vmem:[%s332 + $0x8] sm:$0xff] 0.0
          %378 = vst [vmem:[%s332 + $0x10] sm:$0xff] 0.0
          %379 = vst [vmem:[%s332 + $0x18] sm:$0xff] 0.0
          %380 = vst [vmem:[%s332 + $0x20] sm:$0xff] 0.0
          %381 = vst [vmem:[%s332 + $0x28] sm:$0xff] 0.0
          %382 = vst [vmem:[%s332 + $0x30] sm:$0xff] 0.0
          %383 = vst [vmem:[%s332 + $0x38] sm:$0xff] 0.0
          %384 = vst [vmem:[%s332 + $0x40] sm:$0xff] 0.0
          %385 = vst [vmem:[%s332 + $0x48] sm:$0xff] 0.0
          %386 = vst [vmem:[%s332 + $0x50] sm:$0xff] 0.0
          %387 = vst [vmem:[%s332 + $0x58] sm:$0xff] 0.0
          %388 = vst [vmem:[%s332 + $0x60] sm:$0xff] 0.0
          %389 = vst [vmem:[%s332 + $0x68] sm:$0xff] 0.0
          %390 = vst [vmem:[%s332 + $0x70] sm:$0xff] 0.0
          %391 = vst [vmem:[%s332 + $0x78] sm:$0xff] 0.0
          %392 = vst [vmem:[%s332 + $0x80] sm:$0xff] 0.0
          %393 = vst [vmem:[%s332 + $0x88] sm:$0xff] 0.0
          %394 = vst [vmem:[%s332 + $0x90] sm:$0xff] 0.0
          %395 = vst [vmem:[%s332 + $0x98] sm:$0xff] 0.0
          %396 = vst [vmem:[%s332 + $0xa0] sm:$0xff] 0.0
          %397 = vst [vmem:[%s332 + $0xa8] sm:$0xff] 0.0
          %398 = vst [vmem:[%s332 + $0xb0] sm:$0xff] 0.0
          %399 = vst [vmem:[%s332 + $0xb8] sm:$0xff] 0.0
          %400 = vst [vmem:[%s332 + $0xc0] sm:$0xff] 0.0
          %401 = vst [vmem:[%s332 + $0xc8] sm:$0xff] 0.0
          %402 = vst [vmem:[%s332 + $0xd0] sm:$0xff] 0.0
          %403 = vst [vmem:[%s332 + $0xd8] sm:$0xff] 0.0
          %404 = vst [vmem:[%s332 + $0xe0] sm:$0xff] 0.0
          %405 = vst [vmem:[%s332 + $0xe8] sm:$0xff] 0.0
          %406 = vst [vmem:[%s332 + $0xf0] sm:$0xff] 0.0
          %407 = vst [vmem:[%s332 + $0xf8] sm:$0xff] 0.0
        $region48: #{lora_linear_forward.1} parent=39 // pred_fallthru
          _
        %p408 = scmp.eq.s32.totalorder %s26, 0
        %p409 = pnand %p408, %p372
        %p410 = pneg %p409
        // Predicated region
        $region49: #{lora_linear_forward.1} parent=39 // pred_check
          _
        $region50: #{lora_linear_forward.1} parent=39 // pred_check_branch
          %412 = sbr.rel (%p409) target = $region52
        $region51: #{lora_linear_forward.1} parent=39 // pred_region
          %vm413 = vcmask 64512
          %414 = vst.msk [vmem:[#allocation2] sm:$0xff] %vm413, 0.0
          %415 = vst.msk [vmem:[#allocation2 + $0x8] sm:$0xff] %vm413, 0.0
          %416 = vst.msk [vmem:[#allocation2 + $0x10] sm:$0xff] %vm413, 0.0
          %417 = vst.msk [vmem:[#allocation2 + $0x18] sm:$0xff] %vm413, 0.0
          %418 = vst.msk [vmem:[#allocation2 + $0x20] sm:$0xff] %vm413, 0.0
          %419 = vst.msk [vmem:[#allocation2 + $0x28] sm:$0xff] %vm413, 0.0
          %420 = vst.msk [vmem:[#allocation2 + $0x30] sm:$0xff] %vm413, 0.0
          %421 = vst.msk [vmem:[#allocation2 + $0x38] sm:$0xff] %vm413, 0.0
        $region52: #{lora_linear_forward.1} parent=39 // pred_fallthru
          _
        %v422 = vld [vmem:[%s342] sm:$0xff]
        %v423 = vld [vmem:[%s342 + $0x8] sm:$0xff]
        %v424 = vld [vmem:[%s342 + $0x10] sm:$0xff]
        %v425 = vld [vmem:[%s342 + $0x18] sm:$0xff]
        %v426 = vld [vmem:[%s342 + $0x20] sm:$0xff]
        %v427 = vld [vmem:[%s342 + $0x28] sm:$0xff]
        %v428 = vld [vmem:[%s342 + $0x30] sm:$0xff]
        %v429 = vld [vmem:[%s342 + $0x38] sm:$0xff]
        %v430 = vld [vmem:[%s342 + $0x40] sm:$0xff]
        %v431 = vld [vmem:[%s342 + $0x48] sm:$0xff]
        %v432 = vld [vmem:[%s342 + $0x50] sm:$0xff]
        %v433 = vld [vmem:[%s342 + $0x58] sm:$0xff]
        %v434 = vld [vmem:[%s342 + $0x60] sm:$0xff]
        %v435 = vld [vmem:[%s342 + $0x68] sm:$0xff]
        %v436 = vld [vmem:[%s342 + $0x70] sm:$0xff]
        %v437 = vld [vmem:[%s342 + $0x78] sm:$0xff]
        %v438 = vld [vmem:[%s342 + $0x80] sm:$0xff]
        %v439 = vld [vmem:[%s342 + $0x88] sm:$0xff]
        %v440 = vld [vmem:[%s342 + $0x90] sm:$0xff]
        %v441 = vld [vmem:[%s342 + $0x98] sm:$0xff]
        %v442 = vld [vmem:[%s342 + $0xa0] sm:$0xff]
        %v443 = vld [vmem:[%s342 + $0xa8] sm:$0xff]
        %v444 = vld [vmem:[%s342 + $0xb0] sm:$0xff]
        %v445 = vld [vmem:[%s342 + $0xb8] sm:$0xff]
        %v446 = vld [vmem:[%s332] sm:$0xff]
        %v447 = vld [vmem:[%s332 + $0x8] sm:$0xff]
        %v448 = vld [vmem:[%s332 + $0x10] sm:$0xff]
        %v449 = vld [vmem:[%s332 + $0x18] sm:$0xff]
        %v450 = vld [vmem:[%s332 + $0x20] sm:$0xff]
        %v451 = vld [vmem:[%s332 + $0x28] sm:$0xff]
        %v452 = vld [vmem:[%s332 + $0x30] sm:$0xff]
        %v453 = vld [vmem:[%s332 + $0x38] sm:$0xff]
        %v454 = vld [vmem:[%s332 + $0x40] sm:$0xff]
        %v455 = vld [vmem:[%s332 + $0x48] sm:$0xff]
        %v456 = vld [vmem:[%s332 + $0x50] sm:$0xff]
        %v457 = vld [vmem:[%s332 + $0x58] sm:$0xff]
        %v458 = vld [vmem:[%s332 + $0x60] sm:$0xff]
        %v459 = vld [vmem:[%s332 + $0x68] sm:$0xff]
        %v460 = vld [vmem:[%s332 + $0x70] sm:$0xff]
        %v461 = vld [vmem:[%s332 + $0x78] sm:$0xff]
        %v462 = vld [vmem:[%s332 + $0x80] sm:$0xff]
        %v463 = vld [vmem:[%s332 + $0x88] sm:$0xff]
        %v464 = vld [vmem:[%s332 + $0x90] sm:$0xff]
        %v465 = vld [vmem:[%s332 + $0x98] sm:$0xff]
        %v466 = vld [vmem:[%s332 + $0xa0] sm:$0xff]
        %v467 = vld [vmem:[%s332 + $0xa8] sm:$0xff]
        %v468 = vld [vmem:[%s332 + $0xb0] sm:$0xff]
        %v469 = vld [vmem:[%s332 + $0xb8] sm:$0xff]
        %v470 = vld [vmem:[%s332 + $0xc0] sm:$0xff]
        %v471 = vld [vmem:[%s332 + $0xc8] sm:$0xff]
        %v472 = vld [vmem:[%s332 + $0xd0] sm:$0xff]
        %v473 = vld [vmem:[%s332 + $0xd8] sm:$0xff]
        %v474 = vld [vmem:[%s332 + $0xe0] sm:$0xff]
        %v475 = vld [vmem:[%s332 + $0xe8] sm:$0xff]
        %v476 = vld [vmem:[%s332 + $0xf0] sm:$0xff]
        %v477 = vld [vmem:[%s332 + $0xf8] sm:$0xff]
        %v478 = vld [vmem:[%s354] sm:$0xff]
        %v479 = vld [vmem:[%s354 + $0x8] sm:$0xff]
        %v480 = vld [vmem:[%s354 + $0x10] sm:$0xff]
        %v481 = vld [vmem:[%s354 + $0x18] sm:$0xff]
        %v482 = vld [vmem:[%s354 + $0x20] sm:$0xff]
        %v483 = vld [vmem:[%s354 + $0x28] sm:$0xff]
        %v484 = vld [vmem:[%s354 + $0x30] sm:$0xff]
        %v485 = vld [vmem:[%s354 + $0x38] sm:$0xff]
        %v486 = vld [vmem:[%s354 + $0x40] sm:$0xff]
        %v487 = vld [vmem:[%s354 + $0x48] sm:$0xff]
        %v488 = vld [vmem:[%s354 + $0x50] sm:$0xff]
        %v489 = vld [vmem:[%s354 + $0x58] sm:$0xff]
        %v490 = vld [vmem:[%s354 + $0x60] sm:$0xff]
        %v491 = vld [vmem:[%s354 + $0x68] sm:$0xff]
        %v492 = vld [vmem:[%s354 + $0x70] sm:$0xff]
        %v493 = vld [vmem:[%s354 + $0x78] sm:$0xff]
        %v494 = vld [vmem:[%s354 + $0x80] sm:$0xff]
        %v495 = vld [vmem:[%s354 + $0x88] sm:$0xff]
        %v496 = vld [vmem:[%s354 + $0x90] sm:$0xff]
        %v497 = vld [vmem:[%s354 + $0x98] sm:$0xff]
        %v498 = vld [vmem:[%s354 + $0xa0] sm:$0xff]
        %v499 = vld [vmem:[%s354 + $0xa8] sm:$0xff]
        %v500 = vld [vmem:[%s354 + $0xb0] sm:$0xff]
        %v501 = vld [vmem:[%s354 + $0xb8] sm:$0xff]
        %v502 = vld [vmem:[%s354 + $0xc0] sm:$0xff]
        %v503 = vld [vmem:[%s354 + $0xc8] sm:$0xff]
        %v504 = vld [vmem:[%s354 + $0xd0] sm:$0xff]
        %v505 = vld [vmem:[%s354 + $0xd8] sm:$0xff]
        %v506 = vld [vmem:[%s354 + $0xe0] sm:$0xff]
        %v507 = vld [vmem:[%s354 + $0xe8] sm:$0xff]
        %v508 = vld [vmem:[%s354 + $0xf0] sm:$0xff]
        %v509 = vld [vmem:[%s354 + $0xf8] sm:$0xff]
        %v510 = vld [vmem:[%s354 + $0x100] sm:$0xff]
        %v511 = vld [vmem:[%s354 + $0x108] sm:$0xff]
        %v512 = vld [vmem:[%s354 + $0x110] sm:$0xff]
        %v513 = vld [vmem:[%s354 + $0x118] sm:$0xff]
        %v514 = vld [vmem:[%s354 + $0x120] sm:$0xff]
        %v515 = vld [vmem:[%s354 + $0x128] sm:$0xff]
        %v516 = vld [vmem:[%s354 + $0x130] sm:$0xff]
        %v517 = vld [vmem:[%s354 + $0x138] sm:$0xff]
        %v518 = vld [vmem:[%s354 + $0x140] sm:$0xff]
        %v519 = vld [vmem:[%s354 + $0x148] sm:$0xff]
        %v520 = vld [vmem:[%s354 + $0x150] sm:$0xff]
        %v521 = vld [vmem:[%s354 + $0x158] sm:$0xff]
        %v522 = vld [vmem:[%s354 + $0x160] sm:$0xff]
        %v523 = vld [vmem:[%s354 + $0x168] sm:$0xff]
        %v524 = vld [vmem:[%s354 + $0x170] sm:$0xff]
        %v525 = vld [vmem:[%s354 + $0x178] sm:$0xff]
        %v526 = vld [vmem:[%s354 + $0x180] sm:$0xff]
        %v527 = vld [vmem:[%s354 + $0x188] sm:$0xff]
        %v528 = vld [vmem:[%s354 + $0x190] sm:$0xff]
        %v529 = vld [vmem:[%s354 + $0x198] sm:$0xff]
        %v530 = vld [vmem:[%s354 + $0x1a0] sm:$0xff]
        %v531 = vld [vmem:[%s354 + $0x1a8] sm:$0xff]
        %v532 = vld [vmem:[%s354 + $0x1b0] sm:$0xff]
        %v533 = vld [vmem:[%s354 + $0x1b8] sm:$0xff]
        %v534 = vld [vmem:[%s354 + $0x1c0] sm:$0xff]
        %v535 = vld [vmem:[%s354 + $0x1c8] sm:$0xff]
        %v536 = vld [vmem:[%s354 + $0x1d0] sm:$0xff]
        %v537 = vld [vmem:[%s354 + $0x1d8] sm:$0xff]
        %v538 = vld [vmem:[%s354 + $0x1e0] sm:$0xff]
        %v539 = vld [vmem:[%s354 + $0x1e8] sm:$0xff]
        %v540 = vld [vmem:[%s354 + $0x1f0] sm:$0xff]
        %v541 = vld [vmem:[%s354 + $0x1f8] sm:$0xff]
        %v542 = vld [vmem:[%s354 + $0x200] sm:$0xff]
        %v543 = vld [vmem:[%s354 + $0x208] sm:$0xff]
        %v544 = vld [vmem:[%s354 + $0x210] sm:$0xff]
        %v545 = vld [vmem:[%s354 + $0x218] sm:$0xff]
        %v546 = vld [vmem:[%s354 + $0x220] sm:$0xff]
        %v547 = vld [vmem:[%s354 + $0x228] sm:$0xff]
        %v548 = vld [vmem:[%s354 + $0x230] sm:$0xff]
        %v549 = vld [vmem:[%s354 + $0x238] sm:$0xff]
        %v550 = vld [vmem:[%s354 + $0x240] sm:$0xff]
        %v551 = vld [vmem:[%s354 + $0x248] sm:$0xff]
        %v552 = vld [vmem:[%s354 + $0x250] sm:$0xff]
        %v553 = vld [vmem:[%s354 + $0x258] sm:$0xff]
        %v554 = vld [vmem:[%s354 + $0x260] sm:$0xff]
        %v555 = vld [vmem:[%s354 + $0x268] sm:$0xff]
        %v556 = vld [vmem:[%s354 + $0x270] sm:$0xff]
        %v557 = vld [vmem:[%s354 + $0x278] sm:$0xff]
        %v558 = vld [vmem:[%s354 + $0x280] sm:$0xff]
        %v559 = vld [vmem:[%s354 + $0x288] sm:$0xff]
        %v560 = vld [vmem:[%s354 + $0x290] sm:$0xff]
        %v561 = vld [vmem:[%s354 + $0x298] sm:$0xff]
        %v562 = vld [vmem:[%s354 + $0x2a0] sm:$0xff]
        %v563 = vld [vmem:[%s354 + $0x2a8] sm:$0xff]
        %v564 = vld [vmem:[%s354 + $0x2b0] sm:$0xff]
        %v565 = vld [vmem:[%s354 + $0x2b8] sm:$0xff]
        %v566 = vld [vmem:[%s354 + $0x2c0] sm:$0xff]
        %v567 = vld [vmem:[%s354 + $0x2c8] sm:$0xff]
        %v568 = vld [vmem:[%s354 + $0x2d0] sm:$0xff]
        %v569 = vld [vmem:[%s354 + $0x2d8] sm:$0xff]
        %v570 = vld [vmem:[%s354 + $0x2e0] sm:$0xff]
        %v571 = vld [vmem:[%s354 + $0x2e8] sm:$0xff]
        %v572 = vld [vmem:[%s354 + $0x2f0] sm:$0xff]
        %v573 = vld [vmem:[%s354 + $0x2f8] sm:$0xff]
        %v574 = vld [vmem:[%s354 + $0x300] sm:$0xff]
        %v575 = vld [vmem:[%s354 + $0x308] sm:$0xff]
        %v576 = vld [vmem:[%s354 + $0x310] sm:$0xff]
        %v577 = vld [vmem:[%s354 + $0x318] sm:$0xff]
        %v578 = vld [vmem:[%s354 + $0x320] sm:$0xff]
        %v579 = vld [vmem:[%s354 + $0x328] sm:$0xff]
        %v580 = vld [vmem:[%s354 + $0x330] sm:$0xff]
        %v581 = vld [vmem:[%s354 + $0x338] sm:$0xff]
        %v582 = vld [vmem:[%s354 + $0x340] sm:$0xff]
        %v583 = vld [vmem:[%s354 + $0x348] sm:$0xff]
        %v584 = vld [vmem:[%s354 + $0x350] sm:$0xff]
        %v585 = vld [vmem:[%s354 + $0x358] sm:$0xff]
        %v586 = vld [vmem:[%s354 + $0x360] sm:$0xff]
        %v587 = vld [vmem:[%s354 + $0x368] sm:$0xff]
        %v588 = vld [vmem:[%s354 + $0x370] sm:$0xff]
        %v589 = vld [vmem:[%s354 + $0x378] sm:$0xff]
        %v590 = vld [vmem:[%s354 + $0x380] sm:$0xff]
        %v591 = vld [vmem:[%s354 + $0x388] sm:$0xff]
        %v592 = vld [vmem:[%s354 + $0x390] sm:$0xff]
        %v593 = vld [vmem:[%s354 + $0x398] sm:$0xff]
        %v594 = vld [vmem:[%s354 + $0x3a0] sm:$0xff]
        %v595 = vld [vmem:[%s354 + $0x3a8] sm:$0xff]
        %v596 = vld [vmem:[%s354 + $0x3b0] sm:$0xff]
        %v597 = vld [vmem:[%s354 + $0x3b8] sm:$0xff]
        %v598 = vld [vmem:[%s354 + $0x3c0] sm:$0xff]
        %v599 = vld [vmem:[%s354 + $0x3c8] sm:$0xff]
        %v600 = vld [vmem:[%s354 + $0x3d0] sm:$0xff]
        %v601 = vld [vmem:[%s354 + $0x3d8] sm:$0xff]
        %v602 = vld [vmem:[%s354 + $0x3e0] sm:$0xff]
        %v603 = vld [vmem:[%s354 + $0x3e8] sm:$0xff]
        %v604 = vld [vmem:[%s354 + $0x3f0] sm:$0xff]
        %v605 = vld [vmem:[%s354 + $0x3f8] sm:$0xff]
        %v606 = vld [vmem:[%s354 + $0x400] sm:$0xff]
        %v607 = vld [vmem:[%s354 + $0x408] sm:$0xff]
        %v608 = vld [vmem:[%s354 + $0x410] sm:$0xff]
        %v609 = vld [vmem:[%s354 + $0x418] sm:$0xff]
        %v610 = vld [vmem:[%s354 + $0x420] sm:$0xff]
        %v611 = vld [vmem:[%s354 + $0x428] sm:$0xff]
        %v612 = vld [vmem:[%s354 + $0x430] sm:$0xff]
        %v613 = vld [vmem:[%s354 + $0x438] sm:$0xff]
        %v614 = vld [vmem:[%s354 + $0x440] sm:$0xff]
        %v615 = vld [vmem:[%s354 + $0x448] sm:$0xff]
        %v616 = vld [vmem:[%s354 + $0x450] sm:$0xff]
        %v617 = vld [vmem:[%s354 + $0x458] sm:$0xff]
        %v618 = vld [vmem:[%s354 + $0x460] sm:$0xff]
        %v619 = vld [vmem:[%s354 + $0x468] sm:$0xff]
        %v620 = vld [vmem:[%s354 + $0x470] sm:$0xff]
        %v621 = vld [vmem:[%s354 + $0x478] sm:$0xff]
        %v622 = vld [vmem:[%s354 + $0x480] sm:$0xff]
        %v623 = vld [vmem:[%s354 + $0x488] sm:$0xff]
        %v624 = vld [vmem:[%s354 + $0x490] sm:$0xff]
        %v625 = vld [vmem:[%s354 + $0x498] sm:$0xff]
        %v626 = vld [vmem:[%s354 + $0x4a0] sm:$0xff]
        %v627 = vld [vmem:[%s354 + $0x4a8] sm:$0xff]
        %v628 = vld [vmem:[%s354 + $0x4b0] sm:$0xff]
        %v629 = vld [vmem:[%s354 + $0x4b8] sm:$0xff]
        %v630 = vld [vmem:[%s354 + $0x4c0] sm:$0xff]
        %v631 = vld [vmem:[%s354 + $0x4c8] sm:$0xff]
        %v632 = vld [vmem:[%s354 + $0x4d0] sm:$0xff]
        %v633 = vld [vmem:[%s354 + $0x4d8] sm:$0xff]
        %v634 = vld [vmem:[%s354 + $0x4e0] sm:$0xff]
        %v635 = vld [vmem:[%s354 + $0x4e8] sm:$0xff]
        %v636 = vld [vmem:[%s354 + $0x4f0] sm:$0xff]
        %v637 = vld [vmem:[%s354 + $0x4f8] sm:$0xff]
        %v638 = vld [vmem:[%s354 + $0x500] sm:$0xff]
        %v639 = vld [vmem:[%s354 + $0x508] sm:$0xff]
        %v640 = vld [vmem:[%s354 + $0x510] sm:$0xff]
        %v641 = vld [vmem:[%s354 + $0x518] sm:$0xff]
        %v642 = vld [vmem:[%s354 + $0x520] sm:$0xff]
        %v643 = vld [vmem:[%s354 + $0x528] sm:$0xff]
        %v644 = vld [vmem:[%s354 + $0x530] sm:$0xff]
        %v645 = vld [vmem:[%s354 + $0x538] sm:$0xff]
        %v646 = vld [vmem:[%s354 + $0x540] sm:$0xff]
        %v647 = vld [vmem:[%s354 + $0x548] sm:$0xff]
        %v648 = vld [vmem:[%s354 + $0x550] sm:$0xff]
        %v649 = vld [vmem:[%s354 + $0x558] sm:$0xff]
        %v650 = vld [vmem:[%s354 + $0x560] sm:$0xff]
        %v651 = vld [vmem:[%s354 + $0x568] sm:$0xff]
        %v652 = vld [vmem:[%s354 + $0x570] sm:$0xff]
        %v653 = vld [vmem:[%s354 + $0x578] sm:$0xff]
        %v654 = vld [vmem:[%s354 + $0x580] sm:$0xff]
        %v655 = vld [vmem:[%s354 + $0x588] sm:$0xff]
        %v656 = vld [vmem:[%s354 + $0x590] sm:$0xff]
        %v657 = vld [vmem:[%s354 + $0x598] sm:$0xff]
        %v658 = vld [vmem:[%s354 + $0x5a0] sm:$0xff]
        %v659 = vld [vmem:[%s354 + $0x5a8] sm:$0xff]
        %v660 = vld [vmem:[%s354 + $0x5b0] sm:$0xff]
        %v661 = vld [vmem:[%s354 + $0x5b8] sm:$0xff]
        %v662 = vld [vmem:[%s354 + $0x5c0] sm:$0xff]
        %v663 = vld [vmem:[%s354 + $0x5c8] sm:$0xff]
        %v664 = vld [vmem:[%s354 + $0x5d0] sm:$0xff]
        %v665 = vld [vmem:[%s354 + $0x5d8] sm:$0xff]
        %v666 = vld [vmem:[%s354 + $0x5e0] sm:$0xff]
        %v667 = vld [vmem:[%s354 + $0x5e8] sm:$0xff]
        %v668 = vld [vmem:[%s354 + $0x5f0] sm:$0xff]
        %v669 = vld [vmem:[%s354 + $0x5f8] sm:$0xff]
        %v694 = vunpack.c.l.b16 %v422
        %v695 = vunpack.c.h.b16 %v422
        %v696 = vunpack.c.l.b16 %v423
        %v697 = vunpack.c.h.b16 %v423
        %v698 = vunpack.c.l.b16 %v424
        %v699 = vunpack.c.h.b16 %v424
        %v700 = vunpack.c.l.b16 %v425
        %v701 = vunpack.c.h.b16 %v425
        %v702 = vunpack.c.l.b16 %v426
        %v703 = vunpack.c.h.b16 %v426
        %v704 = vunpack.c.l.b16 %v427
        %v705 = vunpack.c.h.b16 %v427
        %v706 = vunpack.c.l.b16 %v428
        %v707 = vunpack.c.h.b16 %v428
        %v708 = vunpack.c.l.b16 %v429
        %v709 = vunpack.c.h.b16 %v429
        %v710 = vunpack.c.l.b16 %v430
        %v711 = vunpack.c.h.b16 %v430
        %v712 = vunpack.c.l.b16 %v431
        %v713 = vunpack.c.h.b16 %v431
        %v714 = vunpack.c.l.b16 %v432
        %v715 = vunpack.c.h.b16 %v432
        %v716 = vunpack.c.l.b16 %v433
        %v717 = vunpack.c.h.b16 %v433
        %v718 = vunpack.c.l.b16 %v434
        %v719 = vunpack.c.h.b16 %v434
        %v720 = vunpack.c.l.b16 %v435
        %v721 = vunpack.c.h.b16 %v435
        %v722 = vunpack.c.l.b16 %v436
        %v723 = vunpack.c.h.b16 %v436
        %v724 = vunpack.c.l.b16 %v437
        %v725 = vunpack.c.h.b16 %v437
        %v726 = vunpack.c.l.b16 %v438
        %v727 = vunpack.c.h.b16 %v438
        %v728 = vunpack.c.l.b16 %v439
        %v729 = vunpack.c.h.b16 %v439
        %v730 = vunpack.c.l.b16 %v440
        %v731 = vunpack.c.h.b16 %v440
        %v732 = vunpack.c.l.b16 %v441
        %v733 = vunpack.c.h.b16 %v441
        %v734 = vunpack.c.l.b16 %v442
        %v735 = vunpack.c.h.b16 %v442
        %v736 = vunpack.c.l.b16 %v443
        %v737 = vunpack.c.h.b16 %v443
        %v738 = vunpack.c.l.b16 %v444
        %v739 = vunpack.c.h.b16 %v444
        %v740 = vunpack.c.l.b16 %v445
        %v741 = vunpack.c.h.b16 %v445
        %v742 = vpack.c.b16 %v700, %v694
        %v743 = vpack.c.b16 %v701, %v695
        %v744 = vpack.c.b16 %v702, %v696
        %v745 = vpack.c.b16 %v703, %v697
        %v746 = vpack.c.b16 %v704, %v698
        %v747 = vpack.c.b16 %v705, %v699
        %v748 = vpack.c.b16 %v712, %v706
        %v749 = vpack.c.b16 %v713, %v707
        %v750 = vpack.c.b16 %v714, %v708
        %v751 = vpack.c.b16 %v715, %v709
        %v752 = vpack.c.b16 %v716, %v710
        %v753 = vpack.c.b16 %v717, %v711
        %v754 = vpack.c.b16 %v724, %v718
        %v755 = vpack.c.b16 %v725, %v719
        %v756 = vpack.c.b16 %v726, %v720
        %v757 = vpack.c.b16 %v727, %v721
        %v758 = vpack.c.b16 %v728, %v722
        %v759 = vpack.c.b16 %v729, %v723
        %v760 = vpack.c.b16 %v736, %v730
        %v761 = vpack.c.b16 %v737, %v731
        %v762 = vpack.c.b16 %v738, %v732
        %v763 = vpack.c.b16 %v739, %v733
        %v764 = vpack.c.b16 %v740, %v734
        %v765 = vpack.c.b16 %v741, %v735
        %v982 = vunpack.c.l.b16 %v478
        %v983 = vunpack.c.h.b16 %v478
        %v984 = vunpack.c.l.b16 %v479
        %v985 = vunpack.c.h.b16 %v479
        %v986 = vunpack.c.l.b16 %v480
        %v987 = vunpack.c.h.b16 %v480
        %v988 = vunpack.c.l.b16 %v481
        %v989 = vunpack.c.h.b16 %v481
        %v990 = vunpack.c.l.b16 %v482
        %v991 = vunpack.c.h.b16 %v482
        %v992 = vunpack.c.l.b16 %v483
        %v993 = vunpack.c.h.b16 %v483
        %v994 = vunpack.c.l.b16 %v484
        %v995 = vunpack.c.h.b16 %v484
        %v996 = vunpack.c.l.b16 %v485
        %v997 = vunpack.c.h.b16 %v485
        %v998 = vunpack.c.l.b16 %v486
        %v999 = vunpack.c.h.b16 %v486
        %v1000 = vunpack.c.l.b16 %v487
        %v1001 = vunpack.c.h.b16 %v487
        %v1002 = vunpack.c.l.b16 %v488
        %v1003 = vunpack.c.h.b16 %v488
        %v1004 = vunpack.c.l.b16 %v489
        %v1005 = vunpack.c.h.b16 %v489
        %v1006 = vunpack.c.l.b16 %v490
        %v1007 = vunpack.c.h.b16 %v490
        %v1008 = vunpack.c.l.b16 %v491
        %v1009 = vunpack.c.h.b16 %v491
        %v1010 = vunpack.c.l.b16 %v492
        %v1011 = vunpack.c.h.b16 %v492
        %v1012 = vunpack.c.l.b16 %v493
        %v1013 = vunpack.c.h.b16 %v493
        %v1014 = vunpack.c.l.b16 %v494
        %v1015 = vunpack.c.h.b16 %v494
        %v1016 = vunpack.c.l.b16 %v495
        %v1017 = vunpack.c.h.b16 %v495
        %v1018 = vunpack.c.l.b16 %v496
        %v1019 = vunpack.c.h.b16 %v496
        %v1020 = vunpack.c.l.b16 %v497
        %v1021 = vunpack.c.h.b16 %v497
        %v1022 = vunpack.c.l.b16 %v498
        %v1023 = vunpack.c.h.b16 %v498
        %v1024 = vunpack.c.l.b16 %v499
        %v1025 = vunpack.c.h.b16 %v499
        %v1026 = vunpack.c.l.b16 %v500
        %v1027 = vunpack.c.h.b16 %v500
        %v1028 = vunpack.c.l.b16 %v501
        %v1029 = vunpack.c.h.b16 %v501
        %v1030 = vunpack.c.l.b16 %v502
        %v1031 = vunpack.c.h.b16 %v502
        %v1032 = vunpack.c.l.b16 %v503
        %v1033 = vunpack.c.h.b16 %v503
        %v1034 = vunpack.c.l.b16 %v504
        %v1035 = vunpack.c.h.b16 %v504
        %v1036 = vunpack.c.l.b16 %v505
        %v1037 = vunpack.c.h.b16 %v505
        %v1038 = vunpack.c.l.b16 %v506
        %v1039 = vunpack.c.h.b16 %v506
        %v1040 = vunpack.c.l.b16 %v507
        %v1041 = vunpack.c.h.b16 %v507
        %v1042 = vunpack.c.l.b16 %v508
        %v1043 = vunpack.c.h.b16 %v508
        %v1044 = vunpack.c.l.b16 %v509
        %v1045 = vunpack.c.h.b16 %v509
        %v1046 = vunpack.c.l.b16 %v510
        %v1047 = vunpack.c.h.b16 %v510
        %v1048 = vunpack.c.l.b16 %v511
        %v1049 = vunpack.c.h.b16 %v511
        %v1050 = vunpack.c.l.b16 %v512
        %v1051 = vunpack.c.h.b16 %v512
        %v1052 = vunpack.c.l.b16 %v513
        %v1053 = vunpack.c.h.b16 %v513
        %v1054 = vunpack.c.l.b16 %v514
        %v1055 = vunpack.c.h.b16 %v514
        %v1056 = vunpack.c.l.b16 %v515
        %v1057 = vunpack.c.h.b16 %v515
        %v1058 = vunpack.c.l.b16 %v516
        %v1059 = vunpack.c.h.b16 %v516
        %v1060 = vunpack.c.l.b16 %v517
        %v1061 = vunpack.c.h.b16 %v517
        %v1062 = vunpack.c.l.b16 %v518
        %v1063 = vunpack.c.h.b16 %v518
        %v1064 = vunpack.c.l.b16 %v519
        %v1065 = vunpack.c.h.b16 %v519
        %v1066 = vunpack.c.l.b16 %v520
        %v1067 = vunpack.c.h.b16 %v520
        %v1068 = vunpack.c.l.b16 %v521
        %v1069 = vunpack.c.h.b16 %v521
        %v1070 = vunpack.c.l.b16 %v522
        %v1071 = vunpack.c.h.b16 %v522
        %v1072 = vunpack.c.l.b16 %v523
        %v1073 = vunpack.c.h.b16 %v523
        %v1074 = vunpack.c.l.b16 %v524
        %v1075 = vunpack.c.h.b16 %v524
        %v1076 = vunpack.c.l.b16 %v525
        %v1077 = vunpack.c.h.b16 %v525
        %v1078 = vunpack.c.l.b16 %v526
        %v1079 = vunpack.c.h.b16 %v526
        %v1080 = vunpack.c.l.b16 %v527
        %v1081 = vunpack.c.h.b16 %v527
        %v1082 = vunpack.c.l.b16 %v528
        %v1083 = vunpack.c.h.b16 %v528
        %v1084 = vunpack.c.l.b16 %v529
        %v1085 = vunpack.c.h.b16 %v529
        %v1086 = vunpack.c.l.b16 %v530
        %v1087 = vunpack.c.h.b16 %v530
        %v1088 = vunpack.c.l.b16 %v531
        %v1089 = vunpack.c.h.b16 %v531
        %v1090 = vunpack.c.l.b16 %v532
        %v1091 = vunpack.c.h.b16 %v532
        %v1092 = vunpack.c.l.b16 %v533
        %v1093 = vunpack.c.h.b16 %v533
        %v1094 = vunpack.c.l.b16 %v534
        %v1095 = vunpack.c.h.b16 %v534
        %v1096 = vunpack.c.l.b16 %v535
        %v1097 = vunpack.c.h.b16 %v535
        %v1098 = vunpack.c.l.b16 %v536
        %v1099 = vunpack.c.h.b16 %v536
        %v1100 = vunpack.c.l.b16 %v537
        %v1101 = vunpack.c.h.b16 %v537
        %v1102 = vunpack.c.l.b16 %v538
        %v1103 = vunpack.c.h.b16 %v538
        %v1104 = vunpack.c.l.b16 %v539
        %v1105 = vunpack.c.h.b16 %v539
        %v1106 = vunpack.c.l.b16 %v540
        %v1107 = vunpack.c.h.b16 %v540
        %v1108 = vunpack.c.l.b16 %v541
        %v1109 = vunpack.c.h.b16 %v541
        %v1110 = vunpack.c.l.b16 %v542
        %v1111 = vunpack.c.h.b16 %v542
        %v1112 = vunpack.c.l.b16 %v543
        %v1113 = vunpack.c.h.b16 %v543
        %v1114 = vunpack.c.l.b16 %v544
        %v1115 = vunpack.c.h.b16 %v544
        %v1116 = vunpack.c.l.b16 %v545
        %v1117 = vunpack.c.h.b16 %v545
        %v1118 = vunpack.c.l.b16 %v546
        %v1119 = vunpack.c.h.b16 %v546
        %v1120 = vunpack.c.l.b16 %v547
        %v1121 = vunpack.c.h.b16 %v547
        %v1122 = vunpack.c.l.b16 %v548
        %v1123 = vunpack.c.h.b16 %v548
        %v1124 = vunpack.c.l.b16 %v549
        %v1125 = vunpack.c.h.b16 %v549
        %v1126 = vunpack.c.l.b16 %v550
        %v1127 = vunpack.c.h.b16 %v550
        %v1128 = vunpack.c.l.b16 %v551
        %v1129 = vunpack.c.h.b16 %v551
        %v1130 = vunpack.c.l.b16 %v552
        %v1131 = vunpack.c.h.b16 %v552
        %v1132 = vunpack.c.l.b16 %v553
        %v1133 = vunpack.c.h.b16 %v553
        %v1134 = vunpack.c.l.b16 %v554
        %v1135 = vunpack.c.h.b16 %v554
        %v1136 = vunpack.c.l.b16 %v555
        %v1137 = vunpack.c.h.b16 %v555
        %v1138 = vunpack.c.l.b16 %v556
        %v1139 = vunpack.c.h.b16 %v556
        %v1140 = vunpack.c.l.b16 %v557
        %v1141 = vunpack.c.h.b16 %v557
        %v1142 = vunpack.c.l.b16 %v558
        %v1143 = vunpack.c.h.b16 %v558
        %v1144 = vunpack.c.l.b16 %v559
        %v1145 = vunpack.c.h.b16 %v559
        %v1146 = vunpack.c.l.b16 %v560
        %v1147 = vunpack.c.h.b16 %v560
        %v1148 = vunpack.c.l.b16 %v561
        %v1149 = vunpack.c.h.b16 %v561
        %v1150 = vunpack.c.l.b16 %v562
        %v1151 = vunpack.c.h.b16 %v562
        %v1152 = vunpack.c.l.b16 %v563
        %v1153 = vunpack.c.h.b16 %v563
        %v1154 = vunpack.c.l.b16 %v564
        %v1155 = vunpack.c.h.b16 %v564
        %v1156 = vunpack.c.l.b16 %v565
        %v1157 = vunpack.c.h.b16 %v565
        %v1158 = vunpack.c.l.b16 %v566
        %v1159 = vunpack.c.h.b16 %v566
        %v1160 = vunpack.c.l.b16 %v567
        %v1161 = vunpack.c.h.b16 %v567
        %v1162 = vunpack.c.l.b16 %v568
        %v1163 = vunpack.c.h.b16 %v568
        %v1164 = vunpack.c.l.b16 %v569
        %v1165 = vunpack.c.h.b16 %v569
        %v1166 = vunpack.c.l.b16 %v570
        %v1167 = vunpack.c.h.b16 %v570
        %v1168 = vunpack.c.l.b16 %v571
        %v1169 = vunpack.c.h.b16 %v571
        %v1170 = vunpack.c.l.b16 %v572
        %v1171 = vunpack.c.h.b16 %v572
        %v1172 = vunpack.c.l.b16 %v573
        %v1173 = vunpack.c.h.b16 %v573
        %v1174 = vunpack.c.l.b16 %v574
        %v1175 = vunpack.c.h.b16 %v574
        %v1176 = vunpack.c.l.b16 %v575
        %v1177 = vunpack.c.h.b16 %v575
        %v1178 = vunpack.c.l.b16 %v576
        %v1179 = vunpack.c.h.b16 %v576
        %v1180 = vunpack.c.l.b16 %v577
        %v1181 = vunpack.c.h.b16 %v577
        %v1182 = vunpack.c.l.b16 %v578
        %v1183 = vunpack.c.h.b16 %v578
        %v1184 = vunpack.c.l.b16 %v579
        %v1185 = vunpack.c.h.b16 %v579
        %v1186 = vunpack.c.l.b16 %v580
        %v1187 = vunpack.c.h.b16 %v580
        %v1188 = vunpack.c.l.b16 %v581
        %v1189 = vunpack.c.h.b16 %v581
        %v1190 = vunpack.c.l.b16 %v582
        %v1191 = vunpack.c.h.b16 %v582
        %v1192 = vunpack.c.l.b16 %v583
        %v1193 = vunpack.c.h.b16 %v583
        %v1194 = vunpack.c.l.b16 %v584
        %v1195 = vunpack.c.h.b16 %v584
        %v1196 = vunpack.c.l.b16 %v585
        %v1197 = vunpack.c.h.b16 %v585
        %v1198 = vunpack.c.l.b16 %v586
        %v1199 = vunpack.c.h.b16 %v586
        %v1200 = vunpack.c.l.b16 %v587
        %v1201 = vunpack.c.h.b16 %v587
        %v1202 = vunpack.c.l.b16 %v588
        %v1203 = vunpack.c.h.b16 %v588
        %v1204 = vunpack.c.l.b16 %v589
        %v1205 = vunpack.c.h.b16 %v589
        %v1206 = vunpack.c.l.b16 %v590
        %v1207 = vunpack.c.h.b16 %v590
        %v1208 = vunpack.c.l.b16 %v591
        %v1209 = vunpack.c.h.b16 %v591
        %v1210 = vunpack.c.l.b16 %v592
        %v1211 = vunpack.c.h.b16 %v592
        %v1212 = vunpack.c.l.b16 %v593
        %v1213 = vunpack.c.h.b16 %v593
        %v1214 = vunpack.c.l.b16 %v594
        %v1215 = vunpack.c.h.b16 %v594
        %v1216 = vunpack.c.l.b16 %v595
        %v1217 = vunpack.c.h.b16 %v595
        %v1218 = vunpack.c.l.b16 %v596
        %v1219 = vunpack.c.h.b16 %v596
        %v1220 = vunpack.c.l.b16 %v597
        %v1221 = vunpack.c.h.b16 %v597
        %v1222 = vunpack.c.l.b16 %v598
        %v1223 = vunpack.c.h.b16 %v598
        %v1224 = vunpack.c.l.b16 %v599
        %v1225 = vunpack.c.h.b16 %v599
        %v1226 = vunpack.c.l.b16 %v600
        %v1227 = vunpack.c.h.b16 %v600
        %v1228 = vunpack.c.l.b16 %v601
        %v1229 = vunpack.c.h.b16 %v601
        %v1230 = vunpack.c.l.b16 %v602
        %v1231 = vunpack.c.h.b16 %v602
        %v1232 = vunpack.c.l.b16 %v603
        %v1233 = vunpack.c.h.b16 %v603
        %v1234 = vunpack.c.l.b16 %v604
        %v1235 = vunpack.c.h.b16 %v604
        %v1236 = vunpack.c.l.b16 %v605
        %v1237 = vunpack.c.h.b16 %v605
        %v1238 = vunpack.c.l.b16 %v606
        %v1239 = vunpack.c.h.b16 %v606
        %v1240 = vunpack.c.l.b16 %v607
        %v1241 = vunpack.c.h.b16 %v607
        %v1242 = vunpack.c.l.b16 %v608
        %v1243 = vunpack.c.h.b16 %v608
        %v1244 = vunpack.c.l.b16 %v609
        %v1245 = vunpack.c.h.b16 %v609
        %v1246 = vunpack.c.l.b16 %v610
        %v1247 = vunpack.c.h.b16 %v610
        %v1248 = vunpack.c.l.b16 %v611
        %v1249 = vunpack.c.h.b16 %v611
        %v1250 = vunpack.c.l.b16 %v612
        %v1251 = vunpack.c.h.b16 %v612
        %v1252 = vunpack.c.l.b16 %v613
        %v1253 = vunpack.c.h.b16 %v613
        %v1254 = vunpack.c.l.b16 %v614
        %v1255 = vunpack.c.h.b16 %v614
        %v1256 = vunpack.c.l.b16 %v615
        %v1257 = vunpack.c.h.b16 %v615
        %v1258 = vunpack.c.l.b16 %v616
        %v1259 = vunpack.c.h.b16 %v616
        %v1260 = vunpack.c.l.b16 %v617
        %v1261 = vunpack.c.h.b16 %v617
        %v1262 = vunpack.c.l.b16 %v618
        %v1263 = vunpack.c.h.b16 %v618
        %v1264 = vunpack.c.l.b16 %v619
        %v1265 = vunpack.c.h.b16 %v619
        %v1266 = vunpack.c.l.b16 %v620
        %v1267 = vunpack.c.h.b16 %v620
        %v1268 = vunpack.c.l.b16 %v621
        %v1269 = vunpack.c.h.b16 %v621
        %v1270 = vunpack.c.l.b16 %v622
        %v1271 = vunpack.c.h.b16 %v622
        %v1272 = vunpack.c.l.b16 %v623
        %v1273 = vunpack.c.h.b16 %v623
        %v1274 = vunpack.c.l.b16 %v624
        %v1275 = vunpack.c.h.b16 %v624
        %v1276 = vunpack.c.l.b16 %v625
        %v1277 = vunpack.c.h.b16 %v625
        %v1278 = vunpack.c.l.b16 %v626
        %v1279 = vunpack.c.h.b16 %v626
        %v1280 = vunpack.c.l.b16 %v627
        %v1281 = vunpack.c.h.b16 %v627
        %v1282 = vunpack.c.l.b16 %v628
        %v1283 = vunpack.c.h.b16 %v628
        %v1284 = vunpack.c.l.b16 %v629
        %v1285 = vunpack.c.h.b16 %v629
        %v1286 = vunpack.c.l.b16 %v630
        %v1287 = vunpack.c.h.b16 %v630
        %v1288 = vunpack.c.l.b16 %v631
        %v1289 = vunpack.c.h.b16 %v631
        %v1290 = vunpack.c.l.b16 %v632
        %v1291 = vunpack.c.h.b16 %v632
        %v1292 = vunpack.c.l.b16 %v633
        %v1293 = vunpack.c.h.b16 %v633
        %v1294 = vunpack.c.l.b16 %v634
        %v1295 = vunpack.c.h.b16 %v634
        %v1296 = vunpack.c.l.b16 %v635
        %v1297 = vunpack.c.h.b16 %v635
        %v1298 = vunpack.c.l.b16 %v636
        %v1299 = vunpack.c.h.b16 %v636
        %v1300 = vunpack.c.l.b16 %v637
        %v1301 = vunpack.c.h.b16 %v637
        %v1302 = vunpack.c.l.b16 %v638
        %v1303 = vunpack.c.h.b16 %v638
        %v1304 = vunpack.c.l.b16 %v639
        %v1305 = vunpack.c.h.b16 %v639
        %v1306 = vunpack.c.l.b16 %v640
        %v1307 = vunpack.c.h.b16 %v640
        %v1308 = vunpack.c.l.b16 %v641
        %v1309 = vunpack.c.h.b16 %v641
        %v1310 = vunpack.c.l.b16 %v642
        %v1311 = vunpack.c.h.b16 %v642
        %v1312 = vunpack.c.l.b16 %v643
        %v1313 = vunpack.c.h.b16 %v643
        %v1314 = vunpack.c.l.b16 %v644
        %v1315 = vunpack.c.h.b16 %v644
        %v1316 = vunpack.c.l.b16 %v645
        %v1317 = vunpack.c.h.b16 %v645
        %v1318 = vunpack.c.l.b16 %v646
        %v1319 = vunpack.c.h.b16 %v646
        %v1320 = vunpack.c.l.b16 %v647
        %v1321 = vunpack.c.h.b16 %v647
        %v1322 = vunpack.c.l.b16 %v648
        %v1323 = vunpack.c.h.b16 %v648
        %v1324 = vunpack.c.l.b16 %v649
        %v1325 = vunpack.c.h.b16 %v649
        %v1326 = vunpack.c.l.b16 %v650
        %v1327 = vunpack.c.h.b16 %v650
        %v1328 = vunpack.c.l.b16 %v651
        %v1329 = vunpack.c.h.b16 %v651
        %v1330 = vunpack.c.l.b16 %v652
        %v1331 = vunpack.c.h.b16 %v652
        %v1332 = vunpack.c.l.b16 %v653
        %v1333 = vunpack.c.h.b16 %v653
        %v1334 = vunpack.c.l.b16 %v654
        %v1335 = vunpack.c.h.b16 %v654
        %v1336 = vunpack.c.l.b16 %v655
        %v1337 = vunpack.c.h.b16 %v655
        %v1338 = vunpack.c.l.b16 %v656
        %v1339 = vunpack.c.h.b16 %v656
        %v1340 = vunpack.c.l.b16 %v657
        %v1341 = vunpack.c.h.b16 %v657
        %v1342 = vunpack.c.l.b16 %v658
        %v1343 = vunpack.c.h.b16 %v658
        %v1344 = vunpack.c.l.b16 %v659
        %v1345 = vunpack.c.h.b16 %v659
        %v1346 = vunpack.c.l.b16 %v660
        %v1347 = vunpack.c.h.b16 %v660
        %v1348 = vunpack.c.l.b16 %v661
        %v1349 = vunpack.c.h.b16 %v661
        %v1350 = vunpack.c.l.b16 %v662
        %v1351 = vunpack.c.h.b16 %v662
        %v1352 = vunpack.c.l.b16 %v663
        %v1353 = vunpack.c.h.b16 %v663
        %v1354 = vunpack.c.l.b16 %v664
        %v1355 = vunpack.c.h.b16 %v664
        %v1356 = vunpack.c.l.b16 %v665
        %v1357 = vunpack.c.h.b16 %v665
        %v1358 = vunpack.c.l.b16 %v666
        %v1359 = vunpack.c.h.b16 %v666
        %v1360 = vunpack.c.l.b16 %v667
        %v1361 = vunpack.c.h.b16 %v667
        %v1362 = vunpack.c.l.b16 %v668
        %v1363 = vunpack.c.h.b16 %v668
        %v1364 = vunpack.c.l.b16 %v669
        %v1365 = vunpack.c.h.b16 %v669
        %v1366 = vpack.c.b16 %v986, %v982
        %v1367 = vpack.c.b16 %v987, %v983
        %v1368 = vpack.c.b16 %v988, %v984
        %v1369 = vpack.c.b16 %v989, %v985
        %v1370 = vpack.c.b16 %v994, %v990
        %v1371 = vpack.c.b16 %v995, %v991
        %v1372 = vpack.c.b16 %v996, %v992
        %v1373 = vpack.c.b16 %v997, %v993
        %v1374 = vpack.c.b16 %v1002, %v998
        %v1375 = vpack.c.b16 %v1003, %v999
        %v1376 = vpack.c.b16 %v1004, %v1000
        %v1377 = vpack.c.b16 %v1005, %v1001
        %v1378 = vpack.c.b16 %v1010, %v1006
        %v1379 = vpack.c.b16 %v1011, %v1007
        %v1380 = vpack.c.b16 %v1012, %v1008
        %v1381 = vpack.c.b16 %v1013, %v1009
        %v1382 = vpack.c.b16 %v1018, %v1014
        %v1383 = vpack.c.b16 %v1019, %v1015
        %v1384 = vpack.c.b16 %v1020, %v1016
        %v1385 = vpack.c.b16 %v1021, %v1017
        %v1386 = vpack.c.b16 %v1026, %v1022
        %v1387 = vpack.c.b16 %v1027, %v1023
        %v1388 = vpack.c.b16 %v1028, %v1024
        %v1389 = vpack.c.b16 %v1029, %v1025
        %v1390 = vpack.c.b16 %v1034, %v1030
        %v1391 = vpack.c.b16 %v1035, %v1031
        %v1392 = vpack.c.b16 %v1036, %v1032
        %v1393 = vpack.c.b16 %v1037, %v1033
        %v1394 = vpack.c.b16 %v1042, %v1038
        %v1395 = vpack.c.b16 %v1043, %v1039
        %v1396 = vpack.c.b16 %v1044, %v1040
        %v1397 = vpack.c.b16 %v1045, %v1041
        %v1398 = vpack.c.b16 %v1050, %v1046
        %v1399 = vpack.c.b16 %v1051, %v1047
        %v1400 = vpack.c.b16 %v1052, %v1048
        %v1401 = vpack.c.b16 %v1053, %v1049
        %v1402 = vpack.c.b16 %v1058, %v1054
        %v1403 = vpack.c.b16 %v1059, %v1055
        %v1404 = vpack.c.b16 %v1060, %v1056
        %v1405 = vpack.c.b16 %v1061, %v1057
        %v1406 = vpack.c.b16 %v1066, %v1062
        %v1407 = vpack.c.b16 %v1067, %v1063
        %v1408 = vpack.c.b16 %v1068, %v1064
        %v1409 = vpack.c.b16 %v1069, %v1065
        %v1410 = vpack.c.b16 %v1074, %v1070
        %v1411 = vpack.c.b16 %v1075, %v1071
        %v1412 = vpack.c.b16 %v1076, %v1072
        %v1413 = vpack.c.b16 %v1077, %v1073
        %v1414 = vpack.c.b16 %v1082, %v1078
        %v1415 = vpack.c.b16 %v1083, %v1079
        %v1416 = vpack.c.b16 %v1084, %v1080
        %v1417 = vpack.c.b16 %v1085, %v1081
        %v1418 = vpack.c.b16 %v1090, %v1086
        %v1419 = vpack.c.b16 %v1091, %v1087
        %v1420 = vpack.c.b16 %v1092, %v1088
        %v1421 = vpack.c.b16 %v1093, %v1089
        %v1422 = vpack.c.b16 %v1098, %v1094
        %v1423 = vpack.c.b16 %v1099, %v1095
        %v1424 = vpack.c.b16 %v1100, %v1096
        %v1425 = vpack.c.b16 %v1101, %v1097
        %v1426 = vpack.c.b16 %v1106, %v1102
        %v1427 = vpack.c.b16 %v1107, %v1103
        %v1428 = vpack.c.b16 %v1108, %v1104
        %v1429 = vpack.c.b16 %v1109, %v1105
        %v1430 = vpack.c.b16 %v1114, %v1110
        %v1431 = vpack.c.b16 %v1115, %v1111
        %v1432 = vpack.c.b16 %v1116, %v1112
        %v1433 = vpack.c.b16 %v1117, %v1113
        %v1434 = vpack.c.b16 %v1122, %v1118
        %v1435 = vpack.c.b16 %v1123, %v1119
        %v1436 = vpack.c.b16 %v1124, %v1120
        %v1437 = vpack.c.b16 %v1125, %v1121
        %v1438 = vpack.c.b16 %v1130, %v1126
        %v1439 = vpack.c.b16 %v1131, %v1127
        %v1440 = vpack.c.b16 %v1132, %v1128
        %v1441 = vpack.c.b16 %v1133, %v1129
        %v1442 = vpack.c.b16 %v1138, %v1134
        %v1443 = vpack.c.b16 %v1139, %v1135
        %v1444 = vpack.c.b16 %v1140, %v1136
        %v1445 = vpack.c.b16 %v1141, %v1137
        %v1446 = vpack.c.b16 %v1146, %v1142
        %v1447 = vpack.c.b16 %v1147, %v1143
        %v1448 = vpack.c.b16 %v1148, %v1144
        %v1449 = vpack.c.b16 %v1149, %v1145
        %v1450 = vpack.c.b16 %v1154, %v1150
        %v1451 = vpack.c.b16 %v1155, %v1151
        %v1452 = vpack.c.b16 %v1156, %v1152
        %v1453 = vpack.c.b16 %v1157, %v1153
        %v1454 = vpack.c.b16 %v1162, %v1158
        %v1455 = vpack.c.b16 %v1163, %v1159
        %v1456 = vpack.c.b16 %v1164, %v1160
        %v1457 = vpack.c.b16 %v1165, %v1161
        %v1458 = vpack.c.b16 %v1170, %v1166
        %v1459 = vpack.c.b16 %v1171, %v1167
        %v1460 = vpack.c.b16 %v1172, %v1168
        %v1461 = vpack.c.b16 %v1173, %v1169
        %v1462 = vpack.c.b16 %v1178, %v1174
        %v1463 = vpack.c.b16 %v1179, %v1175
        %v1464 = vpack.c.b16 %v1180, %v1176
        %v1465 = vpack.c.b16 %v1181, %v1177
        %v1466 = vpack.c.b16 %v1186, %v1182
        %v1467 = vpack.c.b16 %v1187, %v1183
        %v1468 = vpack.c.b16 %v1188, %v1184
        %v1469 = vpack.c.b16 %v1189, %v1185
        %v1470 = vpack.c.b16 %v1194, %v1190
        %v1471 = vpack.c.b16 %v1195, %v1191
        %v1472 = vpack.c.b16 %v1196, %v1192
        %v1473 = vpack.c.b16 %v1197, %v1193
        %v1474 = vpack.c.b16 %v1202, %v1198
        %v1475 = vpack.c.b16 %v1203, %v1199
        %v1476 = vpack.c.b16 %v1204, %v1200
        %v1477 = vpack.c.b16 %v1205, %v1201
        %v1478 = vpack.c.b16 %v1210, %v1206
        %v1479 = vpack.c.b16 %v1211, %v1207
        %v1480 = vpack.c.b16 %v1212, %v1208
        %v1481 = vpack.c.b16 %v1213, %v1209
        %v1482 = vpack.c.b16 %v1218, %v1214
        %v1483 = vpack.c.b16 %v1219, %v1215
        %v1484 = vpack.c.b16 %v1220, %v1216
        %v1485 = vpack.c.b16 %v1221, %v1217
        %v1486 = vpack.c.b16 %v1226, %v1222
        %v1487 = vpack.c.b16 %v1227, %v1223
        %v1488 = vpack.c.b16 %v1228, %v1224
        %v1489 = vpack.c.b16 %v1229, %v1225
        %v1490 = vpack.c.b16 %v1234, %v1230
        %v1491 = vpack.c.b16 %v1235, %v1231
        %v1492 = vpack.c.b16 %v1236, %v1232
        %v1493 = vpack.c.b16 %v1237, %v1233
        %v1494 = vpack.c.b16 %v1242, %v1238
        %v1495 = vpack.c.b16 %v1243, %v1239
        %v1496 = vpack.c.b16 %v1244, %v1240
        %v1497 = vpack.c.b16 %v1245, %v1241
        %v1498 = vpack.c.b16 %v1250, %v1246
        %v1499 = vpack.c.b16 %v1251, %v1247
        %v1500 = vpack.c.b16 %v1252, %v1248
        %v1501 = vpack.c.b16 %v1253, %v1249
        %v1502 = vpack.c.b16 %v1258, %v1254
        %v1503 = vpack.c.b16 %v1259, %v1255
        %v1504 = vpack.c.b16 %v1260, %v1256
        %v1505 = vpack.c.b16 %v1261, %v1257
        %v1506 = vpack.c.b16 %v1266, %v1262
        %v1507 = vpack.c.b16 %v1267, %v1263
        %v1508 = vpack.c.b16 %v1268, %v1264
        %v1509 = vpack.c.b16 %v1269, %v1265
        %v1510 = vpack.c.b16 %v1274, %v1270
        %v1511 = vpack.c.b16 %v1275, %v1271
        %v1512 = vpack.c.b16 %v1276, %v1272
        %v1513 = vpack.c.b16 %v1277, %v1273
        %v1514 = vpack.c.b16 %v1282, %v1278
        %v1515 = vpack.c.b16 %v1283, %v1279
        %v1516 = vpack.c.b16 %v1284, %v1280
        %v1517 = vpack.c.b16 %v1285, %v1281
        %v1518 = vpack.c.b16 %v1290, %v1286
        %v1519 = vpack.c.b16 %v1291, %v1287
        %v1520 = vpack.c.b16 %v1292, %v1288
        %v1521 = vpack.c.b16 %v1293, %v1289
        %v1522 = vpack.c.b16 %v1298, %v1294
        %v1523 = vpack.c.b16 %v1299, %v1295
        %v1524 = vpack.c.b16 %v1300, %v1296
        %v1525 = vpack.c.b16 %v1301, %v1297
        %v1526 = vpack.c.b16 %v1306, %v1302
        %v1527 = vpack.c.b16 %v1307, %v1303
        %v1528 = vpack.c.b16 %v1308, %v1304
        %v1529 = vpack.c.b16 %v1309, %v1305
        %v1530 = vpack.c.b16 %v1314, %v1310
        %v1531 = vpack.c.b16 %v1315, %v1311
        %v1532 = vpack.c.b16 %v1316, %v1312
        %v1533 = vpack.c.b16 %v1317, %v1313
        %v1534 = vpack.c.b16 %v1322, %v1318
        %v1535 = vpack.c.b16 %v1323, %v1319
        %v1536 = vpack.c.b16 %v1324, %v1320
        %v1537 = vpack.c.b16 %v1325, %v1321
        %v1538 = vpack.c.b16 %v1330, %v1326
        %v1539 = vpack.c.b16 %v1331, %v1327
        %v1540 = vpack.c.b16 %v1332, %v1328
        %v1541 = vpack.c.b16 %v1333, %v1329
        %v1542 = vpack.c.b16 %v1338, %v1334
        %v1543 = vpack.c.b16 %v1339, %v1335
        %v1544 = vpack.c.b16 %v1340, %v1336
        %v1545 = vpack.c.b16 %v1341, %v1337
        %v1546 = vpack.c.b16 %v1346, %v1342
        %v1547 = vpack.c.b16 %v1347, %v1343
        %v1548 = vpack.c.b16 %v1348, %v1344
        %v1549 = vpack.c.b16 %v1349, %v1345
        %v1550 = vpack.c.b16 %v1354, %v1350
        %v1551 = vpack.c.b16 %v1355, %v1351
        %v1552 = vpack.c.b16 %v1356, %v1352
        %v1553 = vpack.c.b16 %v1357, %v1353
        %v1554 = vpack.c.b16 %v1362, %v1358
        %v1555 = vpack.c.b16 %v1363, %v1359
        %v1556 = vpack.c.b16 %v1364, %v1360
        %v1557 = vpack.c.b16 %v1365, %v1361
        %1750 = vmatprep.subr.bf16.mxu0 %v1395
        %1751 = vmatpush1.bf16.msra.mxu0 %v1394
        %1752 = vmatprep.subr.bf16.mxu0 %v1391
        %1753 = vmatpush1.bf16.msra.mxu0 %v1390
        %1754 = vmatprep.subr.bf16.mxu0 %v1387
        %1755 = vmatpush1.bf16.msra.mxu0 %v1386
        %1756 = vmatprep.subr.bf16.mxu0 %v1383
        %1757 = vmatpush1.bf16.msra.mxu0 %v1382
        %1758 = vmatprep.subr.bf16.mxu0 %v1379
        %1759 = vmatpush1.bf16.msra.mxu0 %v1378
        %1760 = vmatprep.subr.bf16.mxu0 %v1375
        %1761 = vmatpush1.bf16.msra.mxu0 %v1374
        %1762 = vmatprep.subr.bf16.mxu0 %v1371
        %1763 = vmatpush1.bf16.msra.mxu0 %v1370
        %1764 = vmatprep.subr.bf16.mxu0 %v1367
        %1765 = vmatpush1.bf16.msra.mxu0 %v1366
        %1766 = vmatprep.subr.bf16.mxu0 %v1427
        %1767 = vmatpush2.bf16.msra.mxu0 %v1426
        %1768 = vmatprep.subr.bf16.mxu0 %v1423
        %1769 = vmatpush2.bf16.msra.mxu0 %v1422
        %1770 = vmatprep.subr.bf16.mxu0 %v1419
        %1771 = vmatpush2.bf16.msra.mxu0 %v1418
        %1772 = vmatprep.subr.bf16.mxu0 %v1415
        %1773 = vmatpush2.bf16.msra.mxu0 %v1414
        %1774 = vmatprep.subr.bf16.mxu0 %v1411
        %1775 = vmatpush2.bf16.msra.mxu0 %v1410
        %1776 = vmatprep.subr.bf16.mxu0 %v1407
        %1777 = vmatpush2.bf16.msra.mxu0 %v1406
        %1778 = vmatprep.subr.bf16.mxu0 %v1403
        %1779 = vmatpush2.bf16.msra.mxu0 %v1402
        %1780 = vmatprep.subr.bf16.mxu0 %v1399
        %1781 = vmatpush2.bf16.msra.mxu0 %v1398
        %1782 = vmatprep.mubr.bf16.mxu0 %v743
        %1783 = vmatmul.mubr.bf16.gmra.mxu0 %v742
        %v1784 = vpop.f32.mrf.mxu0
        %v1785 = vadd.f32 0.0, %v1784
        %v1786 = vpop.f32.mrf.mxu0
        %v1787 = vadd.f32 0.0, %v1786
        %v1788 = vpop.f32.mrf.mxu0
        %v1789 = vadd.f32 0.0, %v1788
        %v1790 = vpop.f32.mrf.mxu0
        %v1791 = vadd.f32 0.0, %v1790
        %1792 = vmatprep.mubr.bf16.mxu0 %v749
        %1793 = vmatmul.mubr.bf16.gmra.mxu0 %v748
        %v1794 = vpop.f32.mrf.mxu0
        %v1795 = vadd.f32 0.0, %v1794
        %v1796 = vpop.f32.mrf.mxu0
        %v1797 = vadd.f32 0.0, %v1796
        %v1798 = vpop.f32.mrf.mxu0
        %v1799 = vadd.f32 0.0, %v1798
        %v1800 = vpop.f32.mrf.mxu0
        %v1801 = vadd.f32 0.0, %v1800
        %1802 = vmatprep.mubr.bf16.mxu0 %v755
        %1803 = vmatmul.mubr.bf16.gmra.mxu0 %v754
        %v1804 = vpop.f32.mrf.mxu0
        %v1805 = vadd.f32 0.0, %v1804
        %v1806 = vpop.f32.mrf.mxu0
        %v1807 = vadd.f32 0.0, %v1806
        %v1808 = vpop.f32.mrf.mxu0
        %v1809 = vadd.f32 0.0, %v1808
        %v1810 = vpop.f32.mrf.mxu0
        %v1811 = vadd.f32 0.0, %v1810
        %1812 = vmatprep.mubr.bf16.mxu0 %v761
        %1813 = vmatmul.mubr.bf16.gmra.mxu0 %v760
        %v1814 = vpop.f32.mrf.mxu0
        %v1815 = vadd.f32 0.0, %v1814
        %v1816 = vpop.f32.mrf.mxu0
        %v1817 = vadd.f32 0.0, %v1816
        %v1818 = vpop.f32.mrf.mxu0
        %v1819 = vadd.f32 0.0, %v1818
        %v1820 = vpop.f32.mrf.mxu0
        %v1821 = vadd.f32 0.0, %v1820
        %1822 = vdwg.mxu0
        %1823 = vmatprep.subr.bf16.mxu0 %v1459
        %1824 = vmatpush1.bf16.msra.mxu0 %v1458
        %1825 = vmatprep.subr.bf16.mxu0 %v1455
        %1826 = vmatpush1.bf16.msra.mxu0 %v1454
        %1827 = vmatprep.subr.bf16.mxu0 %v1451
        %1828 = vmatpush1.bf16.msra.mxu0 %v1450
        %1829 = vmatprep.subr.bf16.mxu0 %v1447
        %1830 = vmatpush1.bf16.msra.mxu0 %v1446
        %1831 = vmatprep.subr.bf16.mxu0 %v1443
        %1832 = vmatpush1.bf16.msra.mxu0 %v1442
        %1833 = vmatprep.subr.bf16.mxu0 %v1439
        %1834 = vmatpush1.bf16.msra.mxu0 %v1438
        %1835 = vmatprep.subr.bf16.mxu0 %v1435
        %1836 = vmatpush1.bf16.msra.mxu0 %v1434
        %1837 = vmatprep.subr.bf16.mxu0 %v1431
        %1838 = vmatpush1.bf16.msra.mxu0 %v1430
        %1839 = vmatprep.subr.bf16.mxu0 %v1491
        %1840 = vmatpush2.bf16.msra.mxu0 %v1490
        %1841 = vmatprep.subr.bf16.mxu0 %v1487
        %1842 = vmatpush2.bf16.msra.mxu0 %v1486
        %1843 = vmatprep.subr.bf16.mxu0 %v1483
        %1844 = vmatpush2.bf16.msra.mxu0 %v1482
        %1845 = vmatprep.subr.bf16.mxu0 %v1479
        %1846 = vmatpush2.bf16.msra.mxu0 %v1478
        %1847 = vmatprep.subr.bf16.mxu0 %v1475
        %1848 = vmatpush2.bf16.msra.mxu0 %v1474
        %1849 = vmatprep.subr.bf16.mxu0 %v1471
        %1850 = vmatpush2.bf16.msra.mxu0 %v1470
        %1851 = vmatprep.subr.bf16.mxu0 %v1467
        %1852 = vmatpush2.bf16.msra.mxu0 %v1466
        %1853 = vmatprep.subr.bf16.mxu0 %v1463
        %1854 = vmatpush2.bf16.msra.mxu0 %v1462
        %1855 = vmatprep.mubr.bf16.mxu0 %v745
        %1856 = vmatmul.mubr.bf16.gmra.mxu0 %v744
        %v1857 = vpop.f32.mrf.mxu0
        %v1858 = vadd.f32 %v1785, %v1857
        %v1859 = vpop.f32.mrf.mxu0
        %v1860 = vadd.f32 %v1787, %v1859
        %v1861 = vpop.f32.mrf.mxu0
        %v1862 = vadd.f32 %v1789, %v1861
        %v1863 = vpop.f32.mrf.mxu0
        %v1864 = vadd.f32 %v1791, %v1863
        %1865 = vmatprep.mubr.bf16.mxu0 %v751
        %1866 = vmatmul.mubr.bf16.gmra.mxu0 %v750
        %v1867 = vpop.f32.mrf.mxu0
        %v1868 = vadd.f32 %v1795, %v1867
        %v1869 = vpop.f32.mrf.mxu0
        %v1870 = vadd.f32 %v1797, %v1869
        %v1871 = vpop.f32.mrf.mxu0
        %v1872 = vadd.f32 %v1799, %v1871
        %v1873 = vpop.f32.mrf.mxu0
        %v1874 = vadd.f32 %v1801, %v1873
        %1875 = vmatprep.mubr.bf16.mxu0 %v757
        %1876 = vmatmul.mubr.bf16.gmra.mxu0 %v756
        %v1877 = vpop.f32.mrf.mxu0
        %v1878 = vadd.f32 %v1805, %v1877
        %v1879 = vpop.f32.mrf.mxu0
        %v1880 = vadd.f32 %v1807, %v1879
        %v1881 = vpop.f32.mrf.mxu0
        %v1882 = vadd.f32 %v1809, %v1881
        %v1883 = vpop.f32.mrf.mxu0
        %v1884 = vadd.f32 %v1811, %v1883
        %1885 = vmatprep.mubr.bf16.mxu0 %v763
        %1886 = vmatmul.mubr.bf16.gmra.mxu0 %v762
        %v1887 = vpop.f32.mrf.mxu0
        %v1888 = vadd.f32 %v1815, %v1887
        %v1889 = vpop.f32.mrf.mxu0
        %v1890 = vadd.f32 %v1817, %v1889
        %v1891 = vpop.f32.mrf.mxu0
        %v1892 = vadd.f32 %v1819, %v1891
        %v1893 = vpop.f32.mrf.mxu0
        %v1894 = vadd.f32 %v1821, %v1893
        %1895 = vdwg.mxu0
        %1896 = vmatprep.subr.bf16.mxu0 %v1523
        %1897 = vmatpush1.bf16.msra.mxu0 %v1522
        %1898 = vmatprep.subr.bf16.mxu0 %v1519
        %1899 = vmatpush1.bf16.msra.mxu0 %v1518
        %1900 = vmatprep.subr.bf16.mxu0 %v1515
        %1901 = vmatpush1.bf16.msra.mxu0 %v1514
        %1902 = vmatprep.subr.bf16.mxu0 %v1511
        %1903 = vmatpush1.bf16.msra.mxu0 %v1510
        %1904 = vmatprep.subr.bf16.mxu0 %v1507
        %1905 = vmatpush1.bf16.msra.mxu0 %v1506
        %1906 = vmatprep.subr.bf16.mxu0 %v1503
        %1907 = vmatpush1.bf16.msra.mxu0 %v1502
        %1908 = vmatprep.subr.bf16.mxu0 %v1499
        %1909 = vmatpush1.bf16.msra.mxu0 %v1498
        %1910 = vmatprep.subr.bf16.mxu0 %v1495
        %1911 = vmatpush1.bf16.msra.mxu0 %v1494
        %1912 = vmatprep.subr.bf16.mxu0 %v1555
        %1913 = vmatpush2.bf16.msra.mxu0 %v1554
        %1914 = vmatprep.subr.bf16.mxu0 %v1551
        %1915 = vmatpush2.bf16.msra.mxu0 %v1550
        %1916 = vmatprep.subr.bf16.mxu0 %v1547
        %1917 = vmatpush2.bf16.msra.mxu0 %v1546
        %1918 = vmatprep.subr.bf16.mxu0 %v1543
        %1919 = vmatpush2.bf16.msra.mxu0 %v1542
        %1920 = vmatprep.subr.bf16.mxu0 %v1539
        %1921 = vmatpush2.bf16.msra.mxu0 %v1538
        %1922 = vmatprep.subr.bf16.mxu0 %v1535
        %1923 = vmatpush2.bf16.msra.mxu0 %v1534
        %1924 = vmatprep.subr.bf16.mxu0 %v1531
        %1925 = vmatpush2.bf16.msra.mxu0 %v1530
        %1926 = vmatprep.subr.bf16.mxu0 %v1527
        %1927 = vmatpush2.bf16.msra.mxu0 %v1526
        %1928 = vmatprep.mubr.bf16.mxu0 %v747
        %1929 = vmatmul.mubr.bf16.gmra.mxu0 %v746
        %v1930 = vpop.f32.mrf.mxu0
        %v1931 = vadd.f32 %v1858, %v1930
        %v1932 = vpop.f32.mrf.mxu0
        %v1933 = vadd.f32 %v1860, %v1932
        %v1934 = vpop.f32.mrf.mxu0
        %v1935 = vadd.f32 %v1862, %v1934
        %v1936 = vpop.f32.mrf.mxu0
        %v1937 = vadd.f32 %v1864, %v1936
        %1938 = vmatprep.mubr.bf16.mxu0 %v753
        %1939 = vmatmul.mubr.bf16.gmra.mxu0 %v752
        %v1940 = vpop.f32.mrf.mxu0
        %v1941 = vadd.f32 %v1868, %v1940
        %v1942 = vpop.f32.mrf.mxu0
        %v1943 = vadd.f32 %v1870, %v1942
        %v1944 = vpop.f32.mrf.mxu0
        %v1945 = vadd.f32 %v1872, %v1944
        %v1946 = vpop.f32.mrf.mxu0
        %v1947 = vadd.f32 %v1874, %v1946
        %1948 = vmatprep.mubr.bf16.mxu0 %v759
        %1949 = vmatmul.mubr.bf16.gmra.mxu0 %v758
        %v1950 = vpop.f32.mrf.mxu0
        %v1951 = vadd.f32 %v1878, %v1950
        %v1952 = vpop.f32.mrf.mxu0
        %v1953 = vadd.f32 %v1880, %v1952
        %v1954 = vpop.f32.mrf.mxu0
        %v1955 = vadd.f32 %v1882, %v1954
        %v1956 = vpop.f32.mrf.mxu0
        %v1957 = vadd.f32 %v1884, %v1956
        %1958 = vmatprep.mubr.bf16.mxu0 %v765
        %1959 = vmatmul.mubr.bf16.gmra.mxu0 %v764
        %v1960 = vpop.f32.mrf.mxu0
        %v1961 = vadd.f32 %v1888, %v1960
        %v1962 = vpop.f32.mrf.mxu0
        %v1963 = vadd.f32 %v1890, %v1962
        %v1964 = vpop.f32.mrf.mxu0
        %v1965 = vadd.f32 %v1892, %v1964
        %v1966 = vpop.f32.mrf.mxu0
        %v1967 = vadd.f32 %v1894, %v1966
        %1968 = vdwg.mxu0
        %1969 = vmatprep.subr.bf16.mxu0 %v1397
        %1970 = vmatpush1.bf16.msra.mxu0 %v1396
        %1971 = vmatprep.subr.bf16.mxu0 %v1393
        %1972 = vmatpush1.bf16.msra.mxu0 %v1392
        %1973 = vmatprep.subr.bf16.mxu0 %v1389
        %1974 = vmatpush1.bf16.msra.mxu0 %v1388
        %1975 = vmatprep.subr.bf16.mxu0 %v1385
        %1976 = vmatpush1.bf16.msra.mxu0 %v1384
        %1977 = vmatprep.subr.bf16.mxu0 %v1381
        %1978 = vmatpush1.bf16.msra.mxu0 %v1380
        %1979 = vmatprep.subr.bf16.mxu0 %v1377
        %1980 = vmatpush1.bf16.msra.mxu0 %v1376
        %1981 = vmatprep.subr.bf16.mxu0 %v1373
        %1982 = vmatpush1.bf16.msra.mxu0 %v1372
        %1983 = vmatprep.subr.bf16.mxu0 %v1369
        %1984 = vmatpush1.bf16.msra.mxu0 %v1368
        %1985 = vmatprep.subr.bf16.mxu0 %v1429
        %1986 = vmatpush2.bf16.msra.mxu0 %v1428
        %1987 = vmatprep.subr.bf16.mxu0 %v1425
        %1988 = vmatpush2.bf16.msra.mxu0 %v1424
        %1989 = vmatprep.subr.bf16.mxu0 %v1421
        %1990 = vmatpush2.bf16.msra.mxu0 %v1420
        %1991 = vmatprep.subr.bf16.mxu0 %v1417
        %1992 = vmatpush2.bf16.msra.mxu0 %v1416
        %1993 = vmatprep.subr.bf16.mxu0 %v1413
        %1994 = vmatpush2.bf16.msra.mxu0 %v1412
        %1995 = vmatprep.subr.bf16.mxu0 %v1409
        %1996 = vmatpush2.bf16.msra.mxu0 %v1408
        %1997 = vmatprep.subr.bf16.mxu0 %v1405
        %1998 = vmatpush2.bf16.msra.mxu0 %v1404
        %1999 = vmatprep.subr.bf16.mxu0 %v1401
        %2000 = vmatpush2.bf16.msra.mxu0 %v1400
        %2001 = vmatprep.mubr.bf16.mxu0 %v743
        %2002 = vmatmul.mubr.bf16.gmra.mxu0 %v742
        %v2003 = vpop.f32.mrf.mxu0
        %v2004 = vadd.f32 0.0, %v2003
        %v2005 = vpop.f32.mrf.mxu0
        %v2006 = vadd.f32 0.0, %v2005
        %v2007 = vpop.f32.mrf.mxu0
        %v2008 = vadd.f32 0.0, %v2007
        %v2009 = vpop.f32.mrf.mxu0
        %v2010 = vadd.f32 0.0, %v2009
        %2011 = vmatprep.mubr.bf16.mxu0 %v749
        %2012 = vmatmul.mubr.bf16.gmra.mxu0 %v748
        %v2013 = vpop.f32.mrf.mxu0
        %v2014 = vadd.f32 0.0, %v2013
        %v2015 = vpop.f32.mrf.mxu0
        %v2016 = vadd.f32 0.0, %v2015
        %v2017 = vpop.f32.mrf.mxu0
        %v2018 = vadd.f32 0.0, %v2017
        %v2019 = vpop.f32.mrf.mxu0
        %v2020 = vadd.f32 0.0, %v2019
        %2021 = vmatprep.mubr.bf16.mxu0 %v755
        %2022 = vmatmul.mubr.bf16.gmra.mxu0 %v754
        %v2023 = vpop.f32.mrf.mxu0
        %v2024 = vadd.f32 0.0, %v2023
        %v2025 = vpop.f32.mrf.mxu0
        %v2026 = vadd.f32 0.0, %v2025
        %v2027 = vpop.f32.mrf.mxu0
        %v2028 = vadd.f32 0.0, %v2027
        %v2029 = vpop.f32.mrf.mxu0
        %v2030 = vadd.f32 0.0, %v2029
        %2031 = vmatprep.mubr.bf16.mxu0 %v761
        %2032 = vmatmul.mubr.bf16.gmra.mxu0 %v760
        %v2033 = vpop.f32.mrf.mxu0
        %v2034 = vadd.f32 0.0, %v2033
        %v2035 = vpop.f32.mrf.mxu0
        %v2036 = vadd.f32 0.0, %v2035
        %v2037 = vpop.f32.mrf.mxu0
        %v2038 = vadd.f32 0.0, %v2037
        %v2039 = vpop.f32.mrf.mxu0
        %v2040 = vadd.f32 0.0, %v2039
        %2041 = vdwg.mxu0
        %2042 = vmatprep.subr.bf16.mxu0 %v1461
        %2043 = vmatpush1.bf16.msra.mxu0 %v1460
        %2044 = vmatprep.subr.bf16.mxu0 %v1457
        %2045 = vmatpush1.bf16.msra.mxu0 %v1456
        %2046 = vmatprep.subr.bf16.mxu0 %v1453
        %2047 = vmatpush1.bf16.msra.mxu0 %v1452
        %2048 = vmatprep.subr.bf16.mxu0 %v1449
        %2049 = vmatpush1.bf16.msra.mxu0 %v1448
        %2050 = vmatprep.subr.bf16.mxu0 %v1445
        %2051 = vmatpush1.bf16.msra.mxu0 %v1444
        %2052 = vmatprep.subr.bf16.mxu0 %v1441
        %2053 = vmatpush1.bf16.msra.mxu0 %v1440
        %2054 = vmatprep.subr.bf16.mxu0 %v1437
        %2055 = vmatpush1.bf16.msra.mxu0 %v1436
        %2056 = vmatprep.subr.bf16.mxu0 %v1433
        %2057 = vmatpush1.bf16.msra.mxu0 %v1432
        %2058 = vmatprep.subr.bf16.mxu0 %v1493
        %2059 = vmatpush2.bf16.msra.mxu0 %v1492
        %2060 = vmatprep.subr.bf16.mxu0 %v1489
        %2061 = vmatpush2.bf16.msra.mxu0 %v1488
        %2062 = vmatprep.subr.bf16.mxu0 %v1485
        %2063 = vmatpush2.bf16.msra.mxu0 %v1484
        %2064 = vmatprep.subr.bf16.mxu0 %v1481
        %2065 = vmatpush2.bf16.msra.mxu0 %v1480
        %2066 = vmatprep.subr.bf16.mxu0 %v1477
        %2067 = vmatpush2.bf16.msra.mxu0 %v1476
        %2068 = vmatprep.subr.bf16.mxu0 %v1473
        %2069 = vmatpush2.bf16.msra.mxu0 %v1472
        %2070 = vmatprep.subr.bf16.mxu0 %v1469
        %2071 = vmatpush2.bf16.msra.mxu0 %v1468
        %2072 = vmatprep.subr.bf16.mxu0 %v1465
        %2073 = vmatpush2.bf16.msra.mxu0 %v1464
        %2074 = vmatprep.mubr.bf16.mxu0 %v745
        %2075 = vmatmul.mubr.bf16.gmra.mxu0 %v744
        %v2076 = vpop.f32.mrf.mxu0
        %v2077 = vadd.f32 %v2004, %v2076
        %v2078 = vpop.f32.mrf.mxu0
        %v2079 = vadd.f32 %v2006, %v2078
        %v2080 = vpop.f32.mrf.mxu0
        %v2081 = vadd.f32 %v2008, %v2080
        %v2082 = vpop.f32.mrf.mxu0
        %v2083 = vadd.f32 %v2010, %v2082
        %2084 = vmatprep.mubr.bf16.mxu0 %v751
        %2085 = vmatmul.mubr.bf16.gmra.mxu0 %v750
        %v2086 = vpop.f32.mrf.mxu0
        %v2087 = vadd.f32 %v2014, %v2086
        %v2088 = vpop.f32.mrf.mxu0
        %v2089 = vadd.f32 %v2016, %v2088
        %v2090 = vpop.f32.mrf.mxu0
        %v2091 = vadd.f32 %v2018, %v2090
        %v2092 = vpop.f32.mrf.mxu0
        %v2093 = vadd.f32 %v2020, %v2092
        %2094 = vmatprep.mubr.bf16.mxu0 %v757
        %2095 = vmatmul.mubr.bf16.gmra.mxu0 %v756
        %v2096 = vpop.f32.mrf.mxu0
        %v2097 = vadd.f32 %v2024, %v2096
        %v2098 = vpop.f32.mrf.mxu0
        %v2099 = vadd.f32 %v2026, %v2098
        %v2100 = vpop.f32.mrf.mxu0
        %v2101 = vadd.f32 %v2028, %v2100
        %v2102 = vpop.f32.mrf.mxu0
        %v2103 = vadd.f32 %v2030, %v2102
        %2104 = vmatprep.mubr.bf16.mxu0 %v763
        %2105 = vmatmul.mubr.bf16.gmra.mxu0 %v762
        %v2106 = vpop.f32.mrf.mxu0
        %v2107 = vadd.f32 %v2034, %v2106
        %v2108 = vpop.f32.mrf.mxu0
        %v2109 = vadd.f32 %v2036, %v2108
        %v2110 = vpop.f32.mrf.mxu0
        %v2111 = vadd.f32 %v2038, %v2110
        %v2112 = vpop.f32.mrf.mxu0
        %v2113 = vadd.f32 %v2040, %v2112
        %2114 = vdwg.mxu0
        %2115 = vmatprep.subr.bf16.mxu0 %v1525
        %2116 = vmatpush1.bf16.msra.mxu0 %v1524
        %2117 = vmatprep.subr.bf16.mxu0 %v1521
        %2118 = vmatpush1.bf16.msra.mxu0 %v1520
        %2119 = vmatprep.subr.bf16.mxu0 %v1517
        %2120 = vmatpush1.bf16.msra.mxu0 %v1516
        %2121 = vmatprep.subr.bf16.mxu0 %v1513
        %2122 = vmatpush1.bf16.msra.mxu0 %v1512
        %2123 = vmatprep.subr.bf16.mxu0 %v1509
        %2124 = vmatpush1.bf16.msra.mxu0 %v1508
        %2125 = vmatprep.subr.bf16.mxu0 %v1505
        %2126 = vmatpush1.bf16.msra.mxu0 %v1504
        %2127 = vmatprep.subr.bf16.mxu0 %v1501
        %2128 = vmatpush1.bf16.msra.mxu0 %v1500
        %2129 = vmatprep.subr.bf16.mxu0 %v1497
        %2130 = vmatpush1.bf16.msra.mxu0 %v1496
        %2131 = vmatprep.subr.bf16.mxu0 %v1557
        %2132 = vmatpush2.bf16.msra.mxu0 %v1556
        %2133 = vmatprep.subr.bf16.mxu0 %v1553
        %2134 = vmatpush2.bf16.msra.mxu0 %v1552
        %2135 = vmatprep.subr.bf16.mxu0 %v1549
        %2136 = vmatpush2.bf16.msra.mxu0 %v1548
        %2137 = vmatprep.subr.bf16.mxu0 %v1545
        %2138 = vmatpush2.bf16.msra.mxu0 %v1544
        %2139 = vmatprep.subr.bf16.mxu0 %v1541
        %2140 = vmatpush2.bf16.msra.mxu0 %v1540
        %2141 = vmatprep.subr.bf16.mxu0 %v1537
        %2142 = vmatpush2.bf16.msra.mxu0 %v1536
        %2143 = vmatprep.subr.bf16.mxu0 %v1533
        %2144 = vmatpush2.bf16.msra.mxu0 %v1532
        %2145 = vmatprep.subr.bf16.mxu0 %v1529
        %2146 = vmatpush2.bf16.msra.mxu0 %v1528
        %2147 = vmatprep.mubr.bf16.mxu0 %v747
        %2148 = vmatmul.mubr.bf16.gmra.mxu0 %v746
        %v2149 = vpop.f32.mrf.mxu0
        %v2150 = vadd.f32 %v2077, %v2149
        %v2151 = vpop.f32.mrf.mxu0
        %v2152 = vadd.f32 %v2079, %v2151
        %v2153 = vpop.f32.mrf.mxu0
        %v2154 = vadd.f32 %v2081, %v2153
        %v2155 = vpop.f32.mrf.mxu0
        %v2156 = vadd.f32 %v2083, %v2155
        %2157 = vmatprep.mubr.bf16.mxu0 %v753
        %2158 = vmatmul.mubr.bf16.gmra.mxu0 %v752
        %v2159 = vpop.f32.mrf.mxu0
        %v2160 = vadd.f32 %v2087, %v2159
        %v2161 = vpop.f32.mrf.mxu0
        %v2162 = vadd.f32 %v2089, %v2161
        %v2163 = vpop.f32.mrf.mxu0
        %v2164 = vadd.f32 %v2091, %v2163
        %v2165 = vpop.f32.mrf.mxu0
        %v2166 = vadd.f32 %v2093, %v2165
        %2167 = vmatprep.mubr.bf16.mxu0 %v759
        %2168 = vmatmul.mubr.bf16.gmra.mxu0 %v758
        %v2169 = vpop.f32.mrf.mxu0
        %v2170 = vadd.f32 %v2097, %v2169
        %v2171 = vpop.f32.mrf.mxu0
        %v2172 = vadd.f32 %v2099, %v2171
        %v2173 = vpop.f32.mrf.mxu0
        %v2174 = vadd.f32 %v2101, %v2173
        %v2175 = vpop.f32.mrf.mxu0
        %v2176 = vadd.f32 %v2103, %v2175
        %2177 = vmatprep.mubr.bf16.mxu0 %v765
        %2178 = vmatmul.mubr.bf16.gmra.mxu0 %v764
        %v2179 = vpop.f32.mrf.mxu0
        %v2180 = vadd.f32 %v2107, %v2179
        %v2181 = vpop.f32.mrf.mxu0
        %v2182 = vadd.f32 %v2109, %v2181
        %v2183 = vpop.f32.mrf.mxu0
        %v2184 = vadd.f32 %v2111, %v2183
        %v2185 = vpop.f32.mrf.mxu0
        %v2186 = vadd.f32 %v2113, %v2185
        %2187 = vdwg.mxu0
        %v2188 = vadd.f32 %v446, %v1931
        %v2189 = vadd.f32 %v447, %v1933
        %v2190 = vadd.f32 %v448, %v2150
        %v2191 = vadd.f32 %v449, %v2152
        %v2192 = vadd.f32 %v450, %v1935
        %v2193 = vadd.f32 %v451, %v1937
        %v2194 = vadd.f32 %v452, %v2154
        %v2195 = vadd.f32 %v453, %v2156
        %v2196 = vadd.f32 %v454, %v1941
        %v2197 = vadd.f32 %v455, %v1943
        %v2198 = vadd.f32 %v456, %v2160
        %v2199 = vadd.f32 %v457, %v2162
        %v2200 = vadd.f32 %v458, %v1945
        %v2201 = vadd.f32 %v459, %v1947
        %v2202 = vadd.f32 %v460, %v2164
        %v2203 = vadd.f32 %v461, %v2166
        %v2204 = vadd.f32 %v462, %v1951
        %v2205 = vadd.f32 %v463, %v1953
        %v2206 = vadd.f32 %v464, %v2170
        %v2207 = vadd.f32 %v465, %v2172
        %v2208 = vadd.f32 %v466, %v1955
        %v2209 = vadd.f32 %v467, %v1957
        %v2210 = vadd.f32 %v468, %v2174
        %v2211 = vadd.f32 %v469, %v2176
        %v2212 = vadd.f32 %v470, %v1961
        %v2213 = vadd.f32 %v471, %v1963
        %v2214 = vadd.f32 %v472, %v2180
        %v2215 = vadd.f32 %v473, %v2182
        %v2216 = vadd.f32 %v474, %v1965
        %v2217 = vadd.f32 %v475, %v1967
        %v2218 = vadd.f32 %v476, %v2184
        %v2219 = vadd.f32 %v477, %v2186
        %2220 = vst [vmem:[%s332] sm:$0xff] %v2188
        %2221 = vst [vmem:[%s332 + $0x8] sm:$0xff] %v2189
        %2222 = vst [vmem:[%s332 + $0x10] sm:$0xff] %v2190
        %2223 = vst [vmem:[%s332 + $0x18] sm:$0xff] %v2191
        %2224 = vst [vmem:[%s332 + $0x20] sm:$0xff] %v2192
        %2225 = vst [vmem:[%s332 + $0x28] sm:$0xff] %v2193
        %2226 = vst [vmem:[%s332 + $0x30] sm:$0xff] %v2194
        %2227 = vst [vmem:[%s332 + $0x38] sm:$0xff] %v2195
        %2228 = vst [vmem:[%s332 + $0x40] sm:$0xff] %v2196
        %2229 = vst [vmem:[%s332 + $0x48] sm:$0xff] %v2197
        %2230 = vst [vmem:[%s332 + $0x50] sm:$0xff] %v2198
        %2231 = vst [vmem:[%s332 + $0x58] sm:$0xff] %v2199
        %2232 = vst [vmem:[%s332 + $0x60] sm:$0xff] %v2200
        %2233 = vst [vmem:[%s332 + $0x68] sm:$0xff] %v2201
        %2234 = vst [vmem:[%s332 + $0x70] sm:$0xff] %v2202
        %2235 = vst [vmem:[%s332 + $0x78] sm:$0xff] %v2203
        %2236 = vst [vmem:[%s332 + $0x80] sm:$0xff] %v2204
        %2237 = vst [vmem:[%s332 + $0x88] sm:$0xff] %v2205
        %2238 = vst [vmem:[%s332 + $0x90] sm:$0xff] %v2206
        %2239 = vst [vmem:[%s332 + $0x98] sm:$0xff] %v2207
        %2240 = vst [vmem:[%s332 + $0xa0] sm:$0xff] %v2208
        %2241 = vst [vmem:[%s332 + $0xa8] sm:$0xff] %v2209
        %2242 = vst [vmem:[%s332 + $0xb0] sm:$0xff] %v2210
        %2243 = vst [vmem:[%s332 + $0xb8] sm:$0xff] %v2211
        %2244 = vst [vmem:[%s332 + $0xc0] sm:$0xff] %v2212
        %2245 = vst [vmem:[%s332 + $0xc8] sm:$0xff] %v2213
        %2246 = vst [vmem:[%s332 + $0xd0] sm:$0xff] %v2214
        %2247 = vst [vmem:[%s332 + $0xd8] sm:$0xff] %v2215
        %2248 = vst [vmem:[%s332 + $0xe0] sm:$0xff] %v2216
        %2249 = vst [vmem:[%s332 + $0xe8] sm:$0xff] %v2217
        %2250 = vst [vmem:[%s332 + $0xf0] sm:$0xff] %v2218
        %2251 = vst [vmem:[%s332 + $0xf8] sm:$0xff] %v2219
        // Predicated region
        $region53: #{lora_linear_forward.1} parent=39 // pred_check
          %p2252 = pneg %p408
        $region54: #{lora_linear_forward.1} parent=39 // pred_check_branch
          %2254 = sbr.rel (%p2252) target = $region56
        $region55: #{lora_linear_forward.1} parent=39 // pred_region
          %v2255 = vld [vmem:[#allocation2] sm:$0xff]
          %v2256 = vld [vmem:[#allocation2 + $0x8] sm:$0xff]
          %v2257 = vld [vmem:[#allocation2 + $0x10] sm:$0xff]
          %v2258 = vld [vmem:[#allocation2 + $0x18] sm:$0xff]
          %v2259 = vld [vmem:[#allocation2 + $0x20] sm:$0xff]
          %v2260 = vld [vmem:[#allocation2 + $0x28] sm:$0xff]
          %v2261 = vld [vmem:[#allocation2 + $0x30] sm:$0xff]
          %v2262 = vld [vmem:[#allocation2 + $0x38] sm:$0xff]
          %v2263 = vld [vmem:[%s361] sm:$0xf]
          %v2264 = vld [vmem:[%s361 + $0x4] sm:$0xf]
          %v2265 = vld [vmem:[%s361 + $0x8] sm:$0xf]
          %v2266 = vld [vmem:[%s361 + $0xc] sm:$0xf]
          %v2267 = vld [vmem:[%s361 + $0x10] sm:$0xf]
          %v2268 = vld [vmem:[%s361 + $0x14] sm:$0xf]
          %v2269 = vld [vmem:[%s361 + $0x18] sm:$0xf]
          %v2270 = vld [vmem:[%s361 + $0x1c] sm:$0xf]
          %v2271 = vld [vmem:[%s361 + $0x20] sm:$0xf]
          %v2272 = vld [vmem:[%s361 + $0x24] sm:$0xf]
          %v2273 = vld [vmem:[%s361 + $0x28] sm:$0xf]
          %v2274 = vld [vmem:[%s361 + $0x2c] sm:$0xf]
          %v2275 = vld [vmem:[%s361 + $0x30] sm:$0xf]
          %v2276 = vld [vmem:[%s361 + $0x34] sm:$0xf]
          %v2277 = vld [vmem:[%s361 + $0x38] sm:$0xf]
          %v2278 = vld [vmem:[%s361 + $0x3c] sm:$0xf]
          %v2279 = vld [vmem:[%s361 + $0x40] sm:$0xf]
          %v2280 = vld [vmem:[%s361 + $0x44] sm:$0xf]
          %v2281 = vld [vmem:[%s361 + $0x48] sm:$0xf]
          %v2282 = vld [vmem:[%s361 + $0x4c] sm:$0xf]
          %v2283 = vld [vmem:[%s361 + $0x50] sm:$0xf]
          %v2284 = vld [vmem:[%s361 + $0x54] sm:$0xf]
          %v2285 = vld [vmem:[%s361 + $0x58] sm:$0xf]
          %v2286 = vld [vmem:[%s361 + $0x5c] sm:$0xf]
          %v2287 = vld [vmem:[%s361 + $0x60] sm:$0xf]
          %v2288 = vld [vmem:[%s361 + $0x64] sm:$0xf]
          %v2289 = vld [vmem:[%s361 + $0x68] sm:$0xf]
          %v2290 = vld [vmem:[%s361 + $0x6c] sm:$0xf]
          %v2291 = vld [vmem:[%s361 + $0x70] sm:$0xf]
          %v2292 = vld [vmem:[%s361 + $0x74] sm:$0xf]
          %v2293 = vld [vmem:[%s361 + $0x78] sm:$0xf]
          %v2294 = vld [vmem:[%s361 + $0x7c] sm:$0xf]
          %v2295 = vld [vmem:[%s361 + $0x80] sm:$0xf]
          %v2296 = vld [vmem:[%s361 + $0x84] sm:$0xf]
          %v2297 = vld [vmem:[%s361 + $0x88] sm:$0xf]
          %v2298 = vld [vmem:[%s361 + $0x8c] sm:$0xf]
          %v2299 = vld [vmem:[%s361 + $0x90] sm:$0xf]
          %v2300 = vld [vmem:[%s361 + $0x94] sm:$0xf]
          %v2301 = vld [vmem:[%s361 + $0x98] sm:$0xf]
          %v2302 = vld [vmem:[%s361 + $0x9c] sm:$0xf]
          %v2303 = vld [vmem:[%s361 + $0xa0] sm:$0xf]
          %v2304 = vld [vmem:[%s361 + $0xa4] sm:$0xf]
          %v2305 = vld [vmem:[%s361 + $0xa8] sm:$0xf]
          %v2306 = vld [vmem:[%s361 + $0xac] sm:$0xf]
          %v2307 = vld [vmem:[%s361 + $0xb0] sm:$0xf]
          %v2308 = vld [vmem:[%s361 + $0xb4] sm:$0xf]
          %v2309 = vld [vmem:[%s361 + $0xb8] sm:$0xf]
          %v2310 = vld [vmem:[%s361 + $0xbc] sm:$0xf]
          %v2311 = vld [vmem:[%s361 + $0xc0] sm:$0xf]
          %v2312 = vld [vmem:[%s361 + $0xc4] sm:$0xf]
          %v2313 = vld [vmem:[%s361 + $0xc8] sm:$0xf]
          %v2314 = vld [vmem:[%s361 + $0xcc] sm:$0xf]
          %v2315 = vld [vmem:[%s361 + $0xd0] sm:$0xf]
          %v2316 = vld [vmem:[%s361 + $0xd4] sm:$0xf]
          %v2317 = vld [vmem:[%s361 + $0xd8] sm:$0xf]
          %v2318 = vld [vmem:[%s361 + $0xdc] sm:$0xf]
          %v2319 = vld [vmem:[%s361 + $0xe0] sm:$0xf]
          %v2320 = vld [vmem:[%s361 + $0xe4] sm:$0xf]
          %v2321 = vld [vmem:[%s361 + $0xe8] sm:$0xf]
          %v2322 = vld [vmem:[%s361 + $0xec] sm:$0xf]
          %v2323 = vld [vmem:[%s361 + $0xf0] sm:$0xf]
          %v2324 = vld [vmem:[%s361 + $0xf4] sm:$0xf]
          %v2325 = vld [vmem:[%s361 + $0xf8] sm:$0xf]
          %v2326 = vld [vmem:[%s361 + $0xfc] sm:$0xf]
          %v2327 = vld [vmem:[%s361 + $0x100] sm:$0xf]
          %v2328 = vld [vmem:[%s361 + $0x104] sm:$0xf]
          %v2329 = vld [vmem:[%s361 + $0x108] sm:$0xf]
          %v2330 = vld [vmem:[%s361 + $0x10c] sm:$0xf]
          %v2331 = vld [vmem:[%s361 + $0x110] sm:$0xf]
          %v2332 = vld [vmem:[%s361 + $0x114] sm:$0xf]
          %v2333 = vld [vmem:[%s361 + $0x118] sm:$0xf]
          %v2334 = vld [vmem:[%s361 + $0x11c] sm:$0xf]
          %v2335 = vld [vmem:[%s361 + $0x120] sm:$0xf]
          %v2336 = vld [vmem:[%s361 + $0x124] sm:$0xf]
          %v2337 = vld [vmem:[%s361 + $0x128] sm:$0xf]
          %v2338 = vld [vmem:[%s361 + $0x12c] sm:$0xf]
          %v2339 = vld [vmem:[%s361 + $0x130] sm:$0xf]
          %v2340 = vld [vmem:[%s361 + $0x134] sm:$0xf]
          %v2341 = vld [vmem:[%s361 + $0x138] sm:$0xf]
          %v2342 = vld [vmem:[%s361 + $0x13c] sm:$0xf]
          %v2343 = vld [vmem:[%s361 + $0x140] sm:$0xf]
          %v2344 = vld [vmem:[%s361 + $0x144] sm:$0xf]
          %v2345 = vld [vmem:[%s361 + $0x148] sm:$0xf]
          %v2346 = vld [vmem:[%s361 + $0x14c] sm:$0xf]
          %v2347 = vld [vmem:[%s361 + $0x150] sm:$0xf]
          %v2348 = vld [vmem:[%s361 + $0x154] sm:$0xf]
          %v2349 = vld [vmem:[%s361 + $0x158] sm:$0xf]
          %v2350 = vld [vmem:[%s361 + $0x15c] sm:$0xf]
          %v2351 = vld [vmem:[%s361 + $0x160] sm:$0xf]
          %v2352 = vld [vmem:[%s361 + $0x164] sm:$0xf]
          %v2353 = vld [vmem:[%s361 + $0x168] sm:$0xf]
          %v2354 = vld [vmem:[%s361 + $0x16c] sm:$0xf]
          %v2355 = vld [vmem:[%s361 + $0x170] sm:$0xf]
          %v2356 = vld [vmem:[%s361 + $0x174] sm:$0xf]
          %v2357 = vld [vmem:[%s361 + $0x178] sm:$0xf]
          %v2358 = vld [vmem:[%s361 + $0x17c] sm:$0xf]
          %v2455 = vunpack.c.l.b16 %v2263
          %v2456 = vunpack.c.l.b16 %v2264
          %v2457 = vunpack.c.l.b16 %v2265
          %v2458 = vunpack.c.l.b16 %v2266
          %v2459 = vunpack.c.l.b16 %v2267
          %v2460 = vunpack.c.l.b16 %v2268
          %v2461 = vunpack.c.l.b16 %v2269
          %v2462 = vunpack.c.l.b16 %v2270
          %v2463 = vunpack.c.l.b16 %v2271
          %v2464 = vunpack.c.l.b16 %v2272
          %v2465 = vunpack.c.l.b16 %v2273
          %v2466 = vunpack.c.l.b16 %v2274
          %v2467 = vunpack.c.l.b16 %v2275
          %v2468 = vunpack.c.l.b16 %v2276
          %v2469 = vunpack.c.l.b16 %v2277
          %v2470 = vunpack.c.l.b16 %v2278
          %v2471 = vunpack.c.l.b16 %v2279
          %v2472 = vunpack.c.l.b16 %v2280
          %v2473 = vunpack.c.l.b16 %v2281
          %v2474 = vunpack.c.l.b16 %v2282
          %v2475 = vunpack.c.l.b16 %v2283
          %v2476 = vunpack.c.l.b16 %v2284
          %v2477 = vunpack.c.l.b16 %v2285
          %v2478 = vunpack.c.l.b16 %v2286
          %v2479 = vunpack.c.l.b16 %v2287
          %v2480 = vunpack.c.l.b16 %v2288
          %v2481 = vunpack.c.l.b16 %v2289
          %v2482 = vunpack.c.l.b16 %v2290
          %v2483 = vunpack.c.l.b16 %v2291
          %v2484 = vunpack.c.l.b16 %v2292
          %v2485 = vunpack.c.l.b16 %v2293
          %v2486 = vunpack.c.l.b16 %v2294
          %v2487 = vunpack.c.l.b16 %v2295
          %v2488 = vunpack.c.l.b16 %v2296
          %v2489 = vunpack.c.l.b16 %v2297
          %v2490 = vunpack.c.l.b16 %v2298
          %v2491 = vunpack.c.l.b16 %v2299
          %v2492 = vunpack.c.l.b16 %v2300
          %v2493 = vunpack.c.l.b16 %v2301
          %v2494 = vunpack.c.l.b16 %v2302
          %v2495 = vunpack.c.l.b16 %v2303
          %v2496 = vunpack.c.l.b16 %v2304
          %v2497 = vunpack.c.l.b16 %v2305
          %v2498 = vunpack.c.l.b16 %v2306
          %v2499 = vunpack.c.l.b16 %v2307
          %v2500 = vunpack.c.l.b16 %v2308
          %v2501 = vunpack.c.l.b16 %v2309
          %v2502 = vunpack.c.l.b16 %v2310
          %v2503 = vunpack.c.l.b16 %v2311
          %v2504 = vunpack.c.l.b16 %v2312
          %v2505 = vunpack.c.l.b16 %v2313
          %v2506 = vunpack.c.l.b16 %v2314
          %v2507 = vunpack.c.l.b16 %v2315
          %v2508 = vunpack.c.l.b16 %v2316
          %v2509 = vunpack.c.l.b16 %v2317
          %v2510 = vunpack.c.l.b16 %v2318
          %v2511 = vunpack.c.l.b16 %v2319
          %v2512 = vunpack.c.l.b16 %v2320
          %v2513 = vunpack.c.l.b16 %v2321
          %v2514 = vunpack.c.l.b16 %v2322
          %v2515 = vunpack.c.l.b16 %v2323
          %v2516 = vunpack.c.l.b16 %v2324
          %v2517 = vunpack.c.l.b16 %v2325
          %v2518 = vunpack.c.l.b16 %v2326
          %v2519 = vunpack.c.l.b16 %v2327
          %v2520 = vunpack.c.l.b16 %v2328
          %v2521 = vunpack.c.l.b16 %v2329
          %v2522 = vunpack.c.l.b16 %v2330
          %v2523 = vunpack.c.l.b16 %v2331
          %v2524 = vunpack.c.l.b16 %v2332
          %v2525 = vunpack.c.l.b16 %v2333
          %v2526 = vunpack.c.l.b16 %v2334
          %v2527 = vunpack.c.l.b16 %v2335
          %v2528 = vunpack.c.l.b16 %v2336
          %v2529 = vunpack.c.l.b16 %v2337
          %v2530 = vunpack.c.l.b16 %v2338
          %v2531 = vunpack.c.l.b16 %v2339
          %v2532 = vunpack.c.l.b16 %v2340
          %v2533 = vunpack.c.l.b16 %v2341
          %v2534 = vunpack.c.l.b16 %v2342
          %v2535 = vunpack.c.l.b16 %v2343
          %v2536 = vunpack.c.l.b16 %v2344
          %v2537 = vunpack.c.l.b16 %v2345
          %v2538 = vunpack.c.l.b16 %v2346
          %v2539 = vunpack.c.l.b16 %v2347
          %v2540 = vunpack.c.l.b16 %v2348
          %v2541 = vunpack.c.l.b16 %v2349
          %v2542 = vunpack.c.l.b16 %v2350
          %v2543 = vunpack.c.l.b16 %v2351
          %v2544 = vunpack.c.l.b16 %v2352
          %v2545 = vunpack.c.l.b16 %v2353
          %v2546 = vunpack.c.l.b16 %v2354
          %v2547 = vunpack.c.l.b16 %v2355
          %v2548 = vunpack.c.l.b16 %v2356
          %v2549 = vunpack.c.l.b16 %v2357
          %v2550 = vunpack.c.l.b16 %v2358
          %v2551 = vpack.c.b16 %v2456, %v2455
          %v2552 = vpack.c.b16 %v2458, %v2457
          %v2553 = vpack.c.b16 %v2460, %v2459
          %v2554 = vpack.c.b16 %v2462, %v2461
          %v2555 = vpack.c.b16 %v2464, %v2463
          %v2556 = vpack.c.b16 %v2466, %v2465
          %v2557 = vpack.c.b16 %v2468, %v2467
          %v2558 = vpack.c.b16 %v2470, %v2469
          %v2559 = vpack.c.b16 %v2472, %v2471
          %v2560 = vpack.c.b16 %v2474, %v2473
          %v2561 = vpack.c.b16 %v2476, %v2475
          %v2562 = vpack.c.b16 %v2478, %v2477
          %v2563 = vpack.c.b16 %v2480, %v2479
          %v2564 = vpack.c.b16 %v2482, %v2481
          %v2565 = vpack.c.b16 %v2484, %v2483
          %v2566 = vpack.c.b16 %v2486, %v2485
          %v2567 = vpack.c.b16 %v2488, %v2487
          %v2568 = vpack.c.b16 %v2490, %v2489
          %v2569 = vpack.c.b16 %v2492, %v2491
          %v2570 = vpack.c.b16 %v2494, %v2493
          %v2571 = vpack.c.b16 %v2496, %v2495
          %v2572 = vpack.c.b16 %v2498, %v2497
          %v2573 = vpack.c.b16 %v2500, %v2499
          %v2574 = vpack.c.b16 %v2502, %v2501
          %v2575 = vpack.c.b16 %v2504, %v2503
          %v2576 = vpack.c.b16 %v2506, %v2505
          %v2577 = vpack.c.b16 %v2508, %v2507
          %v2578 = vpack.c.b16 %v2510, %v2509
          %v2579 = vpack.c.b16 %v2512, %v2511
          %v2580 = vpack.c.b16 %v2514, %v2513
          %v2581 = vpack.c.b16 %v2516, %v2515
          %v2582 = vpack.c.b16 %v2518, %v2517
          %v2583 = vpack.c.b16 %v2520, %v2519
          %v2584 = vpack.c.b16 %v2522, %v2521
          %v2585 = vpack.c.b16 %v2524, %v2523
          %v2586 = vpack.c.b16 %v2526, %v2525
          %v2587 = vpack.c.b16 %v2528, %v2527
          %v2588 = vpack.c.b16 %v2530, %v2529
          %v2589 = vpack.c.b16 %v2532, %v2531
          %v2590 = vpack.c.b16 %v2534, %v2533
          %v2591 = vpack.c.b16 %v2536, %v2535
          %v2592 = vpack.c.b16 %v2538, %v2537
          %v2593 = vpack.c.b16 %v2540, %v2539
          %v2594 = vpack.c.b16 %v2542, %v2541
          %v2595 = vpack.c.b16 %v2544, %v2543
          %v2596 = vpack.c.b16 %v2546, %v2545
          %v2597 = vpack.c.b16 %v2548, %v2547
          %v2598 = vpack.c.b16 %v2550, %v2549
          %2647 = vmatprep.subr.bf16.mxu0 0
          %2648 = vmatpush1.bf16.msra.mxu0 %v2558
          %2649 = vmatprep.subr.bf16.mxu0 0
          %2650 = vmatpush1.bf16.msra.mxu0 %v2557
          %2651 = vmatprep.subr.bf16.mxu0 0
          %2652 = vmatpush1.bf16.msra.mxu0 %v2556
          %2653 = vmatprep.subr.bf16.mxu0 0
          %2654 = vmatpush1.bf16.msra.mxu0 %v2555
          %2655 = vmatprep.subr.bf16.mxu0 0
          %2656 = vmatpush1.bf16.msra.mxu0 %v2554
          %2657 = vmatprep.subr.bf16.mxu0 0
          %2658 = vmatpush1.bf16.msra.mxu0 %v2553
          %2659 = vmatprep.subr.bf16.mxu0 0
          %2660 = vmatpush1.bf16.msra.mxu0 %v2552
          %2661 = vmatprep.subr.bf16.mxu0 0
          %2662 = vmatpush1.bf16.msra.mxu0 %v2551
          %2663 = vmatprep.subr.bf16.mxu0 0
          %2664 = vmatpush2.bf16.msra.mxu0 %v2566
          %2665 = vmatprep.subr.bf16.mxu0 0
          %2666 = vmatpush2.bf16.msra.mxu0 %v2565
          %2667 = vmatprep.subr.bf16.mxu0 0
          %2668 = vmatpush2.bf16.msra.mxu0 %v2564
          %2669 = vmatprep.subr.bf16.mxu0 0
          %2670 = vmatpush2.bf16.msra.mxu0 %v2563
          %2671 = vmatprep.subr.bf16.mxu0 0
          %2672 = vmatpush2.bf16.msra.mxu0 %v2562
          %2673 = vmatprep.subr.bf16.mxu0 0
          %2674 = vmatpush2.bf16.msra.mxu0 %v2561
          %2675 = vmatprep.subr.bf16.mxu0 0
          %2676 = vmatpush2.bf16.msra.mxu0 %v2560
          %2677 = vmatprep.subr.bf16.mxu0 0
          %2678 = vmatpush2.bf16.msra.mxu0 %v2559
          %2679 = vmatprep.mubr.bf16.mxu0 %v743
          %2680 = vmatmul.mubr.bf16.gmra.mxu0 %v742
          %v2681 = vpop.f32.mrf.mxu0
          %v2682 = vadd.f32 0.0, %v2681
          %v2683 = vpop.f32.mrf.mxu0
          %v2684 = vpop.f32.mrf.mxu0
          %v2685 = vadd.f32 0.0, %v2684
          %v2686 = vpop.f32.mrf.mxu0
          %2687 = vmatprep.mubr.bf16.mxu0 %v749
          %2688 = vmatmul.mubr.bf16.gmra.mxu0 %v748
          %v2689 = vpop.f32.mrf.mxu0
          %v2690 = vadd.f32 0.0, %v2689
          %v2691 = vpop.f32.mrf.mxu0
          %v2692 = vpop.f32.mrf.mxu0
          %v2693 = vadd.f32 0.0, %v2692
          %v2694 = vpop.f32.mrf.mxu0
          %2695 = vmatprep.mubr.bf16.mxu0 %v755
          %2696 = vmatmul.mubr.bf16.gmra.mxu0 %v754
          %v2697 = vpop.f32.mrf.mxu0
          %v2698 = vadd.f32 0.0, %v2697
          %v2699 = vpop.f32.mrf.mxu0
          %v2700 = vpop.f32.mrf.mxu0
          %v2701 = vadd.f32 0.0, %v2700
          %v2702 = vpop.f32.mrf.mxu0
          %2703 = vmatprep.mubr.bf16.mxu0 %v761
          %2704 = vmatmul.mubr.bf16.gmra.mxu0 %v760
          %v2705 = vpop.f32.mrf.mxu0
          %v2706 = vadd.f32 0.0, %v2705
          %v2707 = vpop.f32.mrf.mxu0
          %v2708 = vpop.f32.mrf.mxu0
          %v2709 = vadd.f32 0.0, %v2708
          %v2710 = vpop.f32.mrf.mxu0
          %2711 = vdwg.mxu0
          %2712 = vmatprep.subr.bf16.mxu0 0
          %2713 = vmatpush1.bf16.msra.mxu0 %v2574
          %2714 = vmatprep.subr.bf16.mxu0 0
          %2715 = vmatpush1.bf16.msra.mxu0 %v2573
          %2716 = vmatprep.subr.bf16.mxu0 0
          %2717 = vmatpush1.bf16.msra.mxu0 %v2572
          %2718 = vmatprep.subr.bf16.mxu0 0
          %2719 = vmatpush1.bf16.msra.mxu0 %v2571
          %2720 = vmatprep.subr.bf16.mxu0 0
          %2721 = vmatpush1.bf16.msra.mxu0 %v2570
          %2722 = vmatprep.subr.bf16.mxu0 0
          %2723 = vmatpush1.bf16.msra.mxu0 %v2569
          %2724 = vmatprep.subr.bf16.mxu0 0
          %2725 = vmatpush1.bf16.msra.mxu0 %v2568
          %2726 = vmatprep.subr.bf16.mxu0 0
          %2727 = vmatpush1.bf16.msra.mxu0 %v2567
          %2728 = vmatprep.subr.bf16.mxu0 0
          %2729 = vmatpush2.bf16.msra.mxu0 %v2582
          %2730 = vmatprep.subr.bf16.mxu0 0
          %2731 = vmatpush2.bf16.msra.mxu0 %v2581
          %2732 = vmatprep.subr.bf16.mxu0 0
          %2733 = vmatpush2.bf16.msra.mxu0 %v2580
          %2734 = vmatprep.subr.bf16.mxu0 0
          %2735 = vmatpush2.bf16.msra.mxu0 %v2579
          %2736 = vmatprep.subr.bf16.mxu0 0
          %2737 = vmatpush2.bf16.msra.mxu0 %v2578
          %2738 = vmatprep.subr.bf16.mxu0 0
          %2739 = vmatpush2.bf16.msra.mxu0 %v2577
          %2740 = vmatprep.subr.bf16.mxu0 0
          %2741 = vmatpush2.bf16.msra.mxu0 %v2576
          %2742 = vmatprep.subr.bf16.mxu0 0
          %2743 = vmatpush2.bf16.msra.mxu0 %v2575
          %2744 = vmatprep.mubr.bf16.mxu0 %v745
          %2745 = vmatmul.mubr.bf16.gmra.mxu0 %v744
          %v2746 = vpop.f32.mrf.mxu0
          %v2747 = vadd.f32 %v2682, %v2746
          %v2748 = vpop.f32.mrf.mxu0
          %v2749 = vpop.f32.mrf.mxu0
          %v2750 = vadd.f32 %v2685, %v2749
          %v2751 = vpop.f32.mrf.mxu0
          %2752 = vmatprep.mubr.bf16.mxu0 %v751
          %2753 = vmatmul.mubr.bf16.gmra.mxu0 %v750
          %v2754 = vpop.f32.mrf.mxu0
          %v2755 = vadd.f32 %v2690, %v2754
          %v2756 = vpop.f32.mrf.mxu0
          %v2757 = vpop.f32.mrf.mxu0
          %v2758 = vadd.f32 %v2693, %v2757
          %v2759 = vpop.f32.mrf.mxu0
          %2760 = vmatprep.mubr.bf16.mxu0 %v757
          %2761 = vmatmul.mubr.bf16.gmra.mxu0 %v756
          %v2762 = vpop.f32.mrf.mxu0
          %v2763 = vadd.f32 %v2698, %v2762
          %v2764 = vpop.f32.mrf.mxu0
          %v2765 = vpop.f32.mrf.mxu0
          %v2766 = vadd.f32 %v2701, %v2765
          %v2767 = vpop.f32.mrf.mxu0
          %2768 = vmatprep.mubr.bf16.mxu0 %v763
          %2769 = vmatmul.mubr.bf16.gmra.mxu0 %v762
          %v2770 = vpop.f32.mrf.mxu0
          %v2771 = vadd.f32 %v2706, %v2770
          %v2772 = vpop.f32.mrf.mxu0
          %v2773 = vpop.f32.mrf.mxu0
          %v2774 = vadd.f32 %v2709, %v2773
          %v2775 = vpop.f32.mrf.mxu0
          %2776 = vdwg.mxu0
          %2777 = vmatprep.subr.bf16.mxu0 0
          %2778 = vmatpush1.bf16.msra.mxu0 %v2590
          %2779 = vmatprep.subr.bf16.mxu0 0
          %2780 = vmatpush1.bf16.msra.mxu0 %v2589
          %2781 = vmatprep.subr.bf16.mxu0 0
          %2782 = vmatpush1.bf16.msra.mxu0 %v2588
          %2783 = vmatprep.subr.bf16.mxu0 0
          %2784 = vmatpush1.bf16.msra.mxu0 %v2587
          %2785 = vmatprep.subr.bf16.mxu0 0
          %2786 = vmatpush1.bf16.msra.mxu0 %v2586
          %2787 = vmatprep.subr.bf16.mxu0 0
          %2788 = vmatpush1.bf16.msra.mxu0 %v2585
          %2789 = vmatprep.subr.bf16.mxu0 0
          %2790 = vmatpush1.bf16.msra.mxu0 %v2584
          %2791 = vmatprep.subr.bf16.mxu0 0
          %2792 = vmatpush1.bf16.msra.mxu0 %v2583
          %2793 = vmatprep.subr.bf16.mxu0 0
          %2794 = vmatpush2.bf16.msra.mxu0 %v2598
          %2795 = vmatprep.subr.bf16.mxu0 0
          %2796 = vmatpush2.bf16.msra.mxu0 %v2597
          %2797 = vmatprep.subr.bf16.mxu0 0
          %2798 = vmatpush2.bf16.msra.mxu0 %v2596
          %2799 = vmatprep.subr.bf16.mxu0 0
          %2800 = vmatpush2.bf16.msra.mxu0 %v2595
          %2801 = vmatprep.subr.bf16.mxu0 0
          %2802 = vmatpush2.bf16.msra.mxu0 %v2594
          %2803 = vmatprep.subr.bf16.mxu0 0
          %2804 = vmatpush2.bf16.msra.mxu0 %v2593
          %2805 = vmatprep.subr.bf16.mxu0 0
          %2806 = vmatpush2.bf16.msra.mxu0 %v2592
          %2807 = vmatprep.subr.bf16.mxu0 0
          %2808 = vmatpush2.bf16.msra.mxu0 %v2591
          %2809 = vmatprep.mubr.bf16.mxu0 %v747
          %2810 = vmatmul.mubr.bf16.gmra.mxu0 %v746
          %v2811 = vpop.f32.mrf.mxu0
          %v2812 = vadd.f32 %v2747, %v2811
          %v2813 = vpop.f32.mrf.mxu0
          %v2814 = vpop.f32.mrf.mxu0
          %v2815 = vadd.f32 %v2750, %v2814
          %v2816 = vpop.f32.mrf.mxu0
          %2817 = vmatprep.mubr.bf16.mxu0 %v753
          %2818 = vmatmul.mubr.bf16.gmra.mxu0 %v752
          %v2819 = vpop.f32.mrf.mxu0
          %v2820 = vadd.f32 %v2755, %v2819
          %v2821 = vpop.f32.mrf.mxu0
          %v2822 = vpop.f32.mrf.mxu0
          %v2823 = vadd.f32 %v2758, %v2822
          %v2824 = vpop.f32.mrf.mxu0
          %2825 = vmatprep.mubr.bf16.mxu0 %v759
          %2826 = vmatmul.mubr.bf16.gmra.mxu0 %v758
          %v2827 = vpop.f32.mrf.mxu0
          %v2828 = vadd.f32 %v2763, %v2827
          %v2829 = vpop.f32.mrf.mxu0
          %v2830 = vpop.f32.mrf.mxu0
          %v2831 = vadd.f32 %v2766, %v2830
          %v2832 = vpop.f32.mrf.mxu0
          %2833 = vmatprep.mubr.bf16.mxu0 %v765
          %2834 = vmatmul.mubr.bf16.gmra.mxu0 %v764
          %v2835 = vpop.f32.mrf.mxu0
          %v2836 = vadd.f32 %v2771, %v2835
          %v2837 = vpop.f32.mrf.mxu0
          %v2838 = vpop.f32.mrf.mxu0
          %v2839 = vadd.f32 %v2774, %v2838
          %v2840 = vpop.f32.mrf.mxu0
          %2841 = vdwg.mxu0
          %v2842 = vadd.f32 %v2255, %v2812
          %v2843 = vadd.f32 %v2256, %v2815
          %v2844 = vadd.f32 %v2257, %v2820
          %v2845 = vadd.f32 %v2258, %v2823
          %v2846 = vadd.f32 %v2259, %v2828
          %v2847 = vadd.f32 %v2260, %v2831
          %v2848 = vadd.f32 %v2261, %v2836
          %v2849 = vadd.f32 %v2262, %v2839
          %vm2850 = vcmask 64512
          %2851 = vst.msk [vmem:[#allocation2] sm:$0xff] %vm2850, %v2842
          %2852 = vst.msk [vmem:[#allocation2 + $0x8] sm:$0xff] %vm2850, %v2843
          %2853 = vst.msk [vmem:[#allocation2 + $0x10] sm:$0xff] %vm2850, %v2844
          %2854 = vst.msk [vmem:[#allocation2 + $0x18] sm:$0xff] %vm2850, %v2845
          %2855 = vst.msk [vmem:[#allocation2 + $0x20] sm:$0xff] %vm2850, %v2846
          %2856 = vst.msk [vmem:[#allocation2 + $0x28] sm:$0xff] %vm2850, %v2847
          %2857 = vst.msk [vmem:[#allocation2 + $0x30] sm:$0xff] %vm2850, %v2848
          %2858 = vst.msk [vmem:[#allocation2 + $0x38] sm:$0xff] %vm2850, %v2849
        $region56: #{lora_linear_forward.1} parent=39 // pred_fallthru
          _
        // Predicated region
        $region57: #{lora_linear_forward.1} parent=39 // pred_check
          %p2859 = pneg %p372
        $region58: #{lora_linear_forward.1} parent=39 // pred_check_branch
          %2861 = sbr.rel (%p2859) target = $region60
        $region59: #{lora_linear_forward.1} parent=39 // pred_region
          %v2862 = vld [vmem:[#allocation2] sm:$0xff]
          %v2863 = vld [vmem:[#allocation2 + $0x8] sm:$0xff]
          %v2864 = vld [vmem:[#allocation2 + $0x10] sm:$0xff]
          %v2865 = vld [vmem:[#allocation2 + $0x18] sm:$0xff]
          %v2866 = vld [vmem:[#allocation2 + $0x20] sm:$0xff]
          %v2867 = vld [vmem:[#allocation2 + $0x28] sm:$0xff]
          %v2868 = vld [vmem:[#allocation2 + $0x30] sm:$0xff]
          %v2869 = vld [vmem:[#allocation2 + $0x38] sm:$0xff]
          %v2870 = vld [vmem:[#allocation3] sm:$0xff]
          %v2871 = vld [vmem:[#allocation3 + $0x8] sm:$0xff]
          %v2872 = vld [vmem:[#allocation3 + $0x10] sm:$0xff]
          %v2873 = vld [vmem:[#allocation3 + $0x18] sm:$0xff]
          %vm2874 = vcmask 64512
          %v2876 = vsel %vm2874, %v2862, 0
          %v2879 = vsel %vm2874, %v2863, 0
          %v2882 = vsel %vm2874, %v2864, 0
          %v2885 = vsel %vm2874, %v2865, 0
          %v2888 = vsel %vm2874, %v2866, 0
          %v2891 = vsel %vm2874, %v2867, 0
          %v2894 = vsel %vm2874, %v2868, 0
          %v2897 = vsel %vm2874, %v2869, 0
          %2899 = vmatprep.subr.mxu0 0.0
          %2900 = vmatpush1.msra.mxu0 0.0
          %2901 = vmatprep.subr.mxu0 0.0
          %2902 = vmatpush1.msra.mxu0 0.0
          %2903 = vmatprep.subr.mxu0 0.0
          %2904 = vmatpush1.msra.mxu0 0.0
          %2905 = vmatprep.subr.mxu0 0.0
          %2906 = vmatpush1.msra.mxu0 0.0
          %2907 = vmatprep.subr.mxu0 0.0
          %2908 = vmatpush1.msra.mxu0 0.0
          %2909 = vmatprep.subr.mxu0 0.0
          %2910 = vmatpush1.msra.mxu0 0.0
          %2911 = vmatprep.subr.mxu0 0.0
          %2912 = vmatpush1.msra.mxu0 0.0
          %2913 = vmatprep.subr.mxu0 0.0
          %2914 = vmatpush1.msra.mxu0 0.0
          %2915 = vmatprep.subr.mxu0 0.0
          %2916 = vmatpush1.msra.mxu0 0.0
          %2917 = vmatprep.subr.mxu0 0.0
          %2918 = vmatpush1.msra.mxu0 0.0
          %2919 = vmatprep.subr.mxu0 0.0
          %2920 = vmatpush1.msra.mxu0 0.0
          %2921 = vmatprep.subr.mxu0 0.0
          %2922 = vmatpush1.msra.mxu0 0.0
          %2923 = vmatprep.subr.mxu0 0.0
          %2924 = vmatpush1.msra.mxu0 0.0
          %2925 = vmatprep.subr.mxu0 0.0
          %2926 = vmatpush1.msra.mxu0 0.0
          %2927 = vmatprep.subr.mxu0 0.0
          %2928 = vmatpush1.msra.mxu0 0.0
          %2929 = vmatprep.subr.mxu0 %v2871
          %2930 = vmatpush1.msra.mxu0 %v2870
          %2931 = vmatprep.subr.mxu0 0.0
          %2932 = vmatpush2.msra.mxu0 0.0
          %2933 = vmatprep.subr.mxu0 0.0
          %2934 = vmatpush2.msra.mxu0 0.0
          %2935 = vmatprep.subr.mxu0 0.0
          %2936 = vmatpush2.msra.mxu0 0.0
          %2937 = vmatprep.subr.mxu0 0.0
          %2938 = vmatpush2.msra.mxu0 0.0
          %2939 = vmatprep.subr.mxu0 0.0
          %2940 = vmatpush2.msra.mxu0 0.0
          %2941 = vmatprep.subr.mxu0 0.0
          %2942 = vmatpush2.msra.mxu0 0.0
          %2943 = vmatprep.subr.mxu0 0.0
          %2944 = vmatpush2.msra.mxu0 0.0
          %2945 = vmatprep.subr.mxu0 0.0
          %2946 = vmatpush2.msra.mxu0 0.0
          %2947 = vmatprep.subr.mxu0 0.0
          %2948 = vmatpush2.msra.mxu0 0.0
          %2949 = vmatprep.subr.mxu0 0.0
          %2950 = vmatpush2.msra.mxu0 0.0
          %2951 = vmatprep.subr.mxu0 0.0
          %2952 = vmatpush2.msra.mxu0 0.0
          %2953 = vmatprep.subr.mxu0 0.0
          %2954 = vmatpush2.msra.mxu0 0.0
          %2955 = vmatprep.subr.mxu0 0.0
          %2956 = vmatpush2.msra.mxu0 0.0
          %2957 = vmatprep.subr.mxu0 0.0
          %2958 = vmatpush2.msra.mxu0 0.0
          %2959 = vmatprep.subr.mxu0 0.0
          %2960 = vmatpush2.msra.mxu0 0.0
          %2961 = vmatprep.subr.mxu0 0.0
          %2962 = vmatpush2.msra.mxu0 0.0
          %2963 = vmatprep.mubr.f32.mxu0 0.0
          %2964 = vmatmul.mubr.f32.gmra.mxu0 %v2876
          %v2965 = vpop.f32.mrf.mxu0
          %v2966 = vadd.f32 0.0, %v2965
          %v2967 = vpop.f32.mrf.mxu0
          %v2968 = vadd.f32 0.0, %v2967
          %2969 = vmatprep.mubr.f32.mxu0 0.0
          %2970 = vmatmul.mubr.f32.gmra.mxu0 %v2879
          %v2971 = vpop.f32.mrf.mxu0
          %v2972 = vadd.f32 0.0, %v2971
          %v2973 = vpop.f32.mrf.mxu0
          %v2974 = vadd.f32 0.0, %v2973
          %2975 = vmatprep.mubr.f32.mxu0 0.0
          %2976 = vmatmul.mubr.f32.gmra.mxu0 %v2882
          %v2977 = vpop.f32.mrf.mxu0
          %v2978 = vadd.f32 0.0, %v2977
          %v2979 = vpop.f32.mrf.mxu0
          %v2980 = vadd.f32 0.0, %v2979
          %2981 = vmatprep.mubr.f32.mxu0 0.0
          %2982 = vmatmul.mubr.f32.gmra.mxu0 %v2885
          %v2983 = vpop.f32.mrf.mxu0
          %v2984 = vadd.f32 0.0, %v2983
          %v2985 = vpop.f32.mrf.mxu0
          %v2986 = vadd.f32 0.0, %v2985
          %2987 = vmatprep.mubr.f32.mxu0 0.0
          %2988 = vmatmul.mubr.f32.gmra.mxu0 %v2888
          %v2989 = vpop.f32.mrf.mxu0
          %v2990 = vadd.f32 0.0, %v2989
          %v2991 = vpop.f32.mrf.mxu0
          %v2992 = vadd.f32 0.0, %v2991
          %2993 = vmatprep.mubr.f32.mxu0 0.0
          %2994 = vmatmul.mubr.f32.gmra.mxu0 %v2891
          %v2995 = vpop.f32.mrf.mxu0
          %v2996 = vadd.f32 0.0, %v2995
          %v2997 = vpop.f32.mrf.mxu0
          %v2998 = vadd.f32 0.0, %v2997
          %2999 = vmatprep.mubr.f32.mxu0 0.0
          %3000 = vmatmul.mubr.f32.gmra.mxu0 %v2894
          %v3001 = vpop.f32.mrf.mxu0
          %v3002 = vadd.f32 0.0, %v3001
          %v3003 = vpop.f32.mrf.mxu0
          %v3004 = vadd.f32 0.0, %v3003
          %3005 = vmatprep.mubr.f32.mxu0 0.0
          %3006 = vmatmul.mubr.f32.gmra.mxu0 %v2897
          %v3007 = vpop.f32.mrf.mxu0
          %v3008 = vadd.f32 0.0, %v3007
          %v3009 = vpop.f32.mrf.mxu0
          %v3010 = vadd.f32 0.0, %v3009
          %3011 = vdwg.mxu0
          %3012 = vmatprep.subr.mxu0 0.0
          %3013 = vmatpush1.msra.mxu0 0.0
          %3014 = vmatprep.subr.mxu0 0.0
          %3015 = vmatpush1.msra.mxu0 0.0
          %3016 = vmatprep.subr.mxu0 0.0
          %3017 = vmatpush1.msra.mxu0 0.0
          %3018 = vmatprep.subr.mxu0 0.0
          %3019 = vmatpush1.msra.mxu0 0.0
          %3020 = vmatprep.subr.mxu0 0.0
          %3021 = vmatpush1.msra.mxu0 0.0
          %3022 = vmatprep.subr.mxu0 0.0
          %3023 = vmatpush1.msra.mxu0 0.0
          %3024 = vmatprep.subr.mxu0 0.0
          %3025 = vmatpush1.msra.mxu0 0.0
          %3026 = vmatprep.subr.mxu0 0.0
          %3027 = vmatpush1.msra.mxu0 0.0
          %3028 = vmatprep.subr.mxu0 0.0
          %3029 = vmatpush1.msra.mxu0 0.0
          %3030 = vmatprep.subr.mxu0 0.0
          %3031 = vmatpush1.msra.mxu0 0.0
          %3032 = vmatprep.subr.mxu0 0.0
          %3033 = vmatpush1.msra.mxu0 0.0
          %3034 = vmatprep.subr.mxu0 0.0
          %3035 = vmatpush1.msra.mxu0 0.0
          %3036 = vmatprep.subr.mxu0 0.0
          %3037 = vmatpush1.msra.mxu0 0.0
          %3038 = vmatprep.subr.mxu0 0.0
          %3039 = vmatpush1.msra.mxu0 0.0
          %3040 = vmatprep.subr.mxu0 0.0
          %3041 = vmatpush1.msra.mxu0 0.0
          %3042 = vmatprep.subr.mxu0 %v2873
          %3043 = vmatpush1.msra.mxu0 %v2872
          %3044 = vmatprep.subr.mxu0 0.0
          %3045 = vmatpush2.msra.mxu0 0.0
          %3046 = vmatprep.subr.mxu0 0.0
          %3047 = vmatpush2.msra.mxu0 0.0
          %3048 = vmatprep.subr.mxu0 0.0
          %3049 = vmatpush2.msra.mxu0 0.0
          %3050 = vmatprep.subr.mxu0 0.0
          %3051 = vmatpush2.msra.mxu0 0.0
          %3052 = vmatprep.subr.mxu0 0.0
          %3053 = vmatpush2.msra.mxu0 0.0
          %3054 = vmatprep.subr.mxu0 0.0
          %3055 = vmatpush2.msra.mxu0 0.0
          %3056 = vmatprep.subr.mxu0 0.0
          %3057 = vmatpush2.msra.mxu0 0.0
          %3058 = vmatprep.subr.mxu0 0.0
          %3059 = vmatpush2.msra.mxu0 0.0
          %3060 = vmatprep.subr.mxu0 0.0
          %3061 = vmatpush2.msra.mxu0 0.0
          %3062 = vmatprep.subr.mxu0 0.0
          %3063 = vmatpush2.msra.mxu0 0.0
          %3064 = vmatprep.subr.mxu0 0.0
          %3065 = vmatpush2.msra.mxu0 0.0
          %3066 = vmatprep.subr.mxu0 0.0
          %3067 = vmatpush2.msra.mxu0 0.0
          %3068 = vmatprep.subr.mxu0 0.0
          %3069 = vmatpush2.msra.mxu0 0.0
          %3070 = vmatprep.subr.mxu0 0.0
          %3071 = vmatpush2.msra.mxu0 0.0
          %3072 = vmatprep.subr.mxu0 0.0
          %3073 = vmatpush2.msra.mxu0 0.0
          %3074 = vmatprep.subr.mxu0 0.0
          %3075 = vmatpush2.msra.mxu0 0.0
          %3076 = vmatprep.mubr.f32.mxu0 0.0
          %3077 = vmatmul.mubr.f32.gmra.mxu0 %v2876
          %v3078 = vpop.f32.mrf.mxu0
          %v3079 = vadd.f32 0.0, %v3078
          %v3080 = vpop.f32.mrf.mxu0
          %v3081 = vadd.f32 0.0, %v3080
          %3082 = vmatprep.mubr.f32.mxu0 0.0
          %3083 = vmatmul.mubr.f32.gmra.mxu0 %v2879
          %v3084 = vpop.f32.mrf.mxu0
          %v3085 = vadd.f32 0.0, %v3084
          %v3086 = vpop.f32.mrf.mxu0
          %v3087 = vadd.f32 0.0, %v3086
          %3088 = vmatprep.mubr.f32.mxu0 0.0
          %3089 = vmatmul.mubr.f32.gmra.mxu0 %v2882
          %v3090 = vpop.f32.mrf.mxu0
          %v3091 = vadd.f32 0.0, %v3090
          %v3092 = vpop.f32.mrf.mxu0
          %v3093 = vadd.f32 0.0, %v3092
          %3094 = vmatprep.mubr.f32.mxu0 0.0
          %3095 = vmatmul.mubr.f32.gmra.mxu0 %v2885
          %v3096 = vpop.f32.mrf.mxu0
          %v3097 = vadd.f32 0.0, %v3096
          %v3098 = vpop.f32.mrf.mxu0
          %v3099 = vadd.f32 0.0, %v3098
          %3100 = vmatprep.mubr.f32.mxu0 0.0
          %3101 = vmatmul.mubr.f32.gmra.mxu0 %v2888
          %v3102 = vpop.f32.mrf.mxu0
          %v3103 = vadd.f32 0.0, %v3102
          %v3104 = vpop.f32.mrf.mxu0
          %v3105 = vadd.f32 0.0, %v3104
          %3106 = vmatprep.mubr.f32.mxu0 0.0
          %3107 = vmatmul.mubr.f32.gmra.mxu0 %v2891
          %v3108 = vpop.f32.mrf.mxu0
          %v3109 = vadd.f32 0.0, %v3108
          %v3110 = vpop.f32.mrf.mxu0
          %v3111 = vadd.f32 0.0, %v3110
          %3112 = vmatprep.mubr.f32.mxu0 0.0
          %3113 = vmatmul.mubr.f32.gmra.mxu0 %v2894
          %v3114 = vpop.f32.mrf.mxu0
          %v3115 = vadd.f32 0.0, %v3114
          %v3116 = vpop.f32.mrf.mxu0
          %v3117 = vadd.f32 0.0, %v3116
          %3118 = vmatprep.mubr.f32.mxu0 0.0
          %3119 = vmatmul.mubr.f32.gmra.mxu0 %v2897
          %v3120 = vpop.f32.mrf.mxu0
          %v3121 = vadd.f32 0.0, %v3120
          %v3122 = vpop.f32.mrf.mxu0
          %v3123 = vadd.f32 0.0, %v3122
          %3124 = vdwg.mxu0
          %v3125 = vld [vmem:[%s332] sm:$0xff]
          %v3126 = vld [vmem:[%s332 + $0x8] sm:$0xff]
          %v3127 = vld [vmem:[%s332 + $0x10] sm:$0xff]
          %v3128 = vld [vmem:[%s332 + $0x18] sm:$0xff]
          %v3129 = vld [vmem:[%s332 + $0x20] sm:$0xff]
          %v3130 = vld [vmem:[%s332 + $0x28] sm:$0xff]
          %v3131 = vld [vmem:[%s332 + $0x30] sm:$0xff]
          %v3132 = vld [vmem:[%s332 + $0x38] sm:$0xff]
          %v3133 = vld [vmem:[%s332 + $0x40] sm:$0xff]
          %v3134 = vld [vmem:[%s332 + $0x48] sm:$0xff]
          %v3135 = vld [vmem:[%s332 + $0x50] sm:$0xff]
          %v3136 = vld [vmem:[%s332 + $0x58] sm:$0xff]
          %v3137 = vld [vmem:[%s332 + $0x60] sm:$0xff]
          %v3138 = vld [vmem:[%s332 + $0x68] sm:$0xff]
          %v3139 = vld [vmem:[%s332 + $0x70] sm:$0xff]
          %v3140 = vld [vmem:[%s332 + $0x78] sm:$0xff]
          %v3141 = vld [vmem:[%s332 + $0x80] sm:$0xff]
          %v3142 = vld [vmem:[%s332 + $0x88] sm:$0xff]
          %v3143 = vld [vmem:[%s332 + $0x90] sm:$0xff]
          %v3144 = vld [vmem:[%s332 + $0x98] sm:$0xff]
          %v3145 = vld [vmem:[%s332 + $0xa0] sm:$0xff]
          %v3146 = vld [vmem:[%s332 + $0xa8] sm:$0xff]
          %v3147 = vld [vmem:[%s332 + $0xb0] sm:$0xff]
          %v3148 = vld [vmem:[%s332 + $0xb8] sm:$0xff]
          %v3149 = vld [vmem:[%s332 + $0xc0] sm:$0xff]
          %v3150 = vld [vmem:[%s332 + $0xc8] sm:$0xff]
          %v3151 = vld [vmem:[%s332 + $0xd0] sm:$0xff]
          %v3152 = vld [vmem:[%s332 + $0xd8] sm:$0xff]
          %v3153 = vld [vmem:[%s332 + $0xe0] sm:$0xff]
          %v3154 = vld [vmem:[%s332 + $0xe8] sm:$0xff]
          %v3155 = vld [vmem:[%s332 + $0xf0] sm:$0xff]
          %v3156 = vld [vmem:[%s332 + $0xf8] sm:$0xff]
          %v3157 = vadd.f32 %v3125, %v2966
          %v3158 = vadd.f32 %v3126, %v2968
          %v3159 = vadd.f32 %v3127, %v3079
          %v3160 = vadd.f32 %v3128, %v3081
          %v3161 = vadd.f32 %v3129, %v2972
          %v3162 = vadd.f32 %v3130, %v2974
          %v3163 = vadd.f32 %v3131, %v3085
          %v3164 = vadd.f32 %v3132, %v3087
          %v3165 = vadd.f32 %v3133, %v2978
          %v3166 = vadd.f32 %v3134, %v2980
          %v3167 = vadd.f32 %v3135, %v3091
          %v3168 = vadd.f32 %v3136, %v3093
          %v3169 = vadd.f32 %v3137, %v2984
          %v3170 = vadd.f32 %v3138, %v2986
          %v3171 = vadd.f32 %v3139, %v3097
          %v3172 = vadd.f32 %v3140, %v3099
          %v3173 = vadd.f32 %v3141, %v2990
          %v3174 = vadd.f32 %v3142, %v2992
          %v3175 = vadd.f32 %v3143, %v3103
          %v3176 = vadd.f32 %v3144, %v3105
          %v3177 = vadd.f32 %v3145, %v2996
          %v3178 = vadd.f32 %v3146, %v2998
          %v3179 = vadd.f32 %v3147, %v3109
          %v3180 = vadd.f32 %v3148, %v3111
          %v3181 = vadd.f32 %v3149, %v3002
          %v3182 = vadd.f32 %v3150, %v3004
          %v3183 = vadd.f32 %v3151, %v3115
          %v3184 = vadd.f32 %v3152, %v3117
          %v3185 = vadd.f32 %v3153, %v3008
          %v3186 = vadd.f32 %v3154, %v3010
          %v3187 = vadd.f32 %v3155, %v3121
          %v3188 = vadd.f32 %v3156, %v3123
          %v3189 = vld [vmem:[%s367] sm:$0xf]
          %v3191 = vlaneseq
          %v3192 = vshrl.u32 %v3191, 7
          %v3193 = vsub.s32 0, %v3192
          %v3194 = vrot.slane %v3189, %v3193
          %v3195 = vlaneseq
          %v3196 = vshrl.u32 %v3195, 7
          %v3197 = vsub.s32 1, %v3196
          %v3198 = vrot.slane %v3189, %v3197
          %v3199 = vlaneseq
          %v3200 = vshrl.u32 %v3199, 7
          %v3201 = vsub.s32 2, %v3200
          %v3202 = vrot.slane %v3189, %v3201
          %v3203 = vlaneseq
          %v3204 = vshrl.u32 %v3203, 7
          %v3205 = vsub.s32 3, %v3204
          %v3206 = vrot.slane %v3189, %v3205
          %v3211 = vadd.f32 %v3157, %v3194
          %v3212 = vadd.f32 %v3158, %v3198
          %v3213 = vadd.f32 %v3159, %v3202
          %v3214 = vadd.f32 %v3160, %v3206
          %v3215 = vadd.f32 %v3161, %v3194
          %v3216 = vadd.f32 %v3162, %v3198
          %v3217 = vadd.f32 %v3163, %v3202
          %v3218 = vadd.f32 %v3164, %v3206
          %v3219 = vadd.f32 %v3165, %v3194
          %v3220 = vadd.f32 %v3166, %v3198
          %v3221 = vadd.f32 %v3167, %v3202
          %v3222 = vadd.f32 %v3168, %v3206
          %v3223 = vadd.f32 %v3169, %v3194
          %v3224 = vadd.f32 %v3170, %v3198
          %v3225 = vadd.f32 %v3171, %v3202
          %v3226 = vadd.f32 %v3172, %v3206
          %v3227 = vadd.f32 %v3173, %v3194
          %v3228 = vadd.f32 %v3174, %v3198
          %v3229 = vadd.f32 %v3175, %v3202
          %v3230 = vadd.f32 %v3176, %v3206
          %v3231 = vadd.f32 %v3177, %v3194
          %v3232 = vadd.f32 %v3178, %v3198
          %v3233 = vadd.f32 %v3179, %v3202
          %v3234 = vadd.f32 %v3180, %v3206
          %v3235 = vadd.f32 %v3181, %v3194
          %v3236 = vadd.f32 %v3182, %v3198
          %v3237 = vadd.f32 %v3183, %v3202
          %v3238 = vadd.f32 %v3184, %v3206
          %v3239 = vadd.f32 %v3185, %v3194
          %v3240 = vadd.f32 %v3186, %v3198
          %v3241 = vadd.f32 %v3187, %v3202
          %v3242 = vadd.f32 %v3188, %v3206
          %3243 = vst [vmem:[%s332] sm:$0xff] %v3211
          %3244 = vst [vmem:[%s332 + $0x8] sm:$0xff] %v3212
          %3245 = vst [vmem:[%s332 + $0x10] sm:$0xff] %v3213
          %3246 = vst [vmem:[%s332 + $0x18] sm:$0xff] %v3214
          %3247 = vst [vmem:[%s332 + $0x20] sm:$0xff] %v3215
          %3248 = vst [vmem:[%s332 + $0x28] sm:$0xff] %v3216
          %3249 = vst [vmem:[%s332 + $0x30] sm:$0xff] %v3217
          %3250 = vst [vmem:[%s332 + $0x38] sm:$0xff] %v3218
          %3251 = vst [vmem:[%s332 + $0x40] sm:$0xff] %v3219
          %3252 = vst [vmem:[%s332 + $0x48] sm:$0xff] %v3220
          %3253 = vst [vmem:[%s332 + $0x50] sm:$0xff] %v3221
          %3254 = vst [vmem:[%s332 + $0x58] sm:$0xff] %v3222
          %3255 = vst [vmem:[%s332 + $0x60] sm:$0xff] %v3223
          %3256 = vst [vmem:[%s332 + $0x68] sm:$0xff] %v3224
          %3257 = vst [vmem:[%s332 + $0x70] sm:$0xff] %v3225
          %3258 = vst [vmem:[%s332 + $0x78] sm:$0xff] %v3226
          %3259 = vst [vmem:[%s332 + $0x80] sm:$0xff] %v3227
          %3260 = vst [vmem:[%s332 + $0x88] sm:$0xff] %v3228
          %3261 = vst [vmem:[%s332 + $0x90] sm:$0xff] %v3229
          %3262 = vst [vmem:[%s332 + $0x98] sm:$0xff] %v3230
          %3263 = vst [vmem:[%s332 + $0xa0] sm:$0xff] %v3231
          %3264 = vst [vmem:[%s332 + $0xa8] sm:$0xff] %v3232
          %3265 = vst [vmem:[%s332 + $0xb0] sm:$0xff] %v3233
          %3266 = vst [vmem:[%s332 + $0xb8] sm:$0xff] %v3234
          %3267 = vst [vmem:[%s332 + $0xc0] sm:$0xff] %v3235
          %3268 = vst [vmem:[%s332 + $0xc8] sm:$0xff] %v3236
          %3269 = vst [vmem:[%s332 + $0xd0] sm:$0xff] %v3237
          %3270 = vst [vmem:[%s332 + $0xd8] sm:$0xff] %v3238
          %3271 = vst [vmem:[%s332 + $0xe0] sm:$0xff] %v3239
          %3272 = vst [vmem:[%s332 + $0xe8] sm:$0xff] %v3240
          %3273 = vst [vmem:[%s332 + $0xf0] sm:$0xff] %v3241
          %3274 = vst [vmem:[%s332 + $0xf8] sm:$0xff] %v3242
        $region60: #{lora_linear_forward.1} parent=39 // pred_fallthru
          _
        %s3275 = sand.u32 %s183, 1
        %s3276 = scalar_lea.sflag [#allocation5], %s3275
        %s3277 = sand.u32 %s183, 1
        %s3278 = smul.addr %s3277, 256
        %s3279 = scalar_lea.vmem [#allocation6], %s3278
        // Predicated region
        $region61: #{lora_linear_forward.1} parent=39 // pred_check
          %p3280 = pneg %p193
        $region62: #{lora_linear_forward.1} parent=39 // pred_check_branch
          %3282 = sbr.rel (%p3280) target = $region64
        $region63: #{lora_linear_forward.1} parent=39 // pred_region
          %s3283 = smul.u32 8, %s25
          %s3284 = smul.u32 4, %s26
          %s3286 = ssub.s32 4096, 4096
          %3287 = vsyncadd %s3276, %s3286
          %s3288 = smul.addr %s3283, 4
          %s3289 = sadd.s32 %s3284, %s3288
          %s3290 = smul.addr %s3289, 128
          %s3291 = scalar_lea.hbm %s5, %s3290
          %s3292 = sshll.u32 %s3279, 4
          %s3293 = int_to_ptr.vmem [resolvable:$true] %s3292
          %3298 = dma.vmem_to_hbm [thread:$0]  %s3293, 4096, %s3291, %s3276, 512, 512, 32
        $region64: #{lora_linear_forward.1} parent=39 // pred_fallthru
          _
      $region40: #{lora_linear_forward.1} parent=5 // pred_fallthru
        _
      %p3299 = scmp.le.s32.totalorder 2, %s15
      // Predicated region
      $region65: #{lora_linear_forward.1} parent=5 // pred_check
        %p3300 = pneg %p3299
      $region66: #{lora_linear_forward.1} parent=5 // pred_check_branch
        %3302 = sbr.rel (%p3300) target = $region68
      $region67: #{lora_linear_forward.1} parent=5 // pred_region
        %s3303 = ssub.s32 %s15, 2
        // Predicated region
        $region69: #{lora_linear_forward.1} parent=67 // pred_check
          %p3304 = pneg %p199
        $region70: #{lora_linear_forward.1} parent=67 // pred_check_branch
          %3306 = sbr.rel (%p3304) target = $region72
        $region71: #{lora_linear_forward.1} parent=67 // pred_region
          %s3307 = sand.u32 %s184, 1
          %s3308 = scalar_lea.sflag [#allocation5], %s3307
          %s3309 = sand.u32 %s184, 1
          %s3310 = smul.addr %s3309, 256
          %s3311 = scalar_lea.vmem [#allocation6], %s3310
          %3312 = dma.done %s3308, 4096
        $region72: #{lora_linear_forward.1} parent=67 // pred_fallthru
          _
      $region68: #{lora_linear_forward.1} parent=5 // pred_fallthru
        _
    $region6: #{lora_linear_forward.1} parent=1 // loop_footer
      %s19 = sadd.s32 1, %s15
    $region7: #{lora_linear_forward.1} parent=1 // loop_footer_branch
      %14 = sbr.rel target = $region3
    $region8: #{lora_linear_forward.1} parent=1 // loop_exit
      _
    %3313 = vsyncpa [#allocation4], 1
    %s3314 = scalar_lea.sflag [#allocation4], 1
    %3315 = vsyncpa %s3314, 1
    %3316 = vsyncpa [#allocation5], 1
    %s3317 = scalar_lea.sflag [#allocation5], 1
    %3318 = vsyncpa %s3317, 1

</llo_original>
